<compile_context>
chip_gen: v5e
topology: v5e:2x2
jax: 0.10.0
libtpu: 0.0.40
codegen_flags: <defaults>
</compile_context>

<pallas_src>
import jax
import jax.numpy as jnp
from jax import lax
from jax.experimental import pallas as pl
from jax.experimental.pallas import tpu as pltpu


def _make_attention_kernel(N, C, G, hd):
    Ghd = G * hd

    def kernel(x_ref, wqkv_ref, wp_ref, b_ref, o_ref, acc_ref):
        g = pl.program_id(1)

        @pl.when(g == 0)
        def _():
            # Bias folded into the accumulator init.
            acc_ref[...] = jnp.broadcast_to(b_ref[...], acc_ref.shape)

        x = x_ref[0]                     # (N, C)        bf16
        w = wqkv_ref[g]                  # (C, 3*Ghd)    bf16, VMEM-resident
        wp = wp_ref[g]                   # (Ghd, C)      bf16, VMEM-resident

        # Fused, lane-dense QKV projection for this head group.  The softmax
        # scale is pre-folded into the Q columns on the host.  f32 accumulate.
        qkv = jnp.dot(x, w, preferred_element_type=jnp.float32)   # (N, 3*Ghd)

        o_parts = []
        for i in range(G):               # static unroll over heads in group
            lo = i * hd
            q_h = qkv[:, lo:lo + hd].astype(jnp.bfloat16)               # (N, hd)
            k_h = qkv[:, Ghd + lo:Ghd + lo + hd].astype(jnp.bfloat16)   # (N, hd)
            v_h = qkv[:, 2 * Ghd + lo:2 * Ghd + lo + hd].astype(jnp.bfloat16)

            # scores = q @ k^T with bf16 operands, f32 accumulation; k is
            # consumed untransposed (contraction on dim 1 of both operands).
            s = lax.dot_general(q_h, k_h, (((1,), (1,)), ((), ())),
                                preferred_element_type=jnp.float32)     # (N, N)

            # Softmax kept fully in f32; normalization deferred to the (N, hd)
            # head output via an approximate EUP reciprocal.
            m = jnp.max(s, axis=-1, keepdims=True)
            p = jnp.exp(s - m)
            denom = jnp.sum(p, axis=-1, keepdims=True)                   # (N, 1)

            o_h = jnp.dot(p.astype(jnp.bfloat16), v_h,
                          preferred_element_type=jnp.float32)            # (N, hd)
            o_h = o_h * pl.reciprocal(denom, approx=True)
            o_parts.append(o_h.astype(jnp.bfloat16))

        o_grp = o_parts[0] if G == 1 else jnp.concatenate(o_parts, axis=-1)

        # Lane-dense (K = G*hd) fold of this head group straight into the
        # output-projection accumulator resident in VMEM across the group axis.
        acc_ref[...] += jnp.dot(o_grp, wp, preferred_element_type=jnp.float32)

        @pl.when(g == pl.num_programs(1) - 1)
        def _():
            o_ref[0] = acc_ref[...].astype(o_ref.dtype)

    return kernel


def attention_forward(x, w_qkv, w_proj, b_proj, num_heads,
                      compute_dtype=jnp.bfloat16):
    """DINO Attention forward.

    x: (B, N, C); w_qkv: (3C, C); w_proj: (C, C); b_proj: (C,)  (PyTorch
    nn.Linear layout, qkv_bias=False, proj_bias=True).
    """
    B, N, C = x.shape
    H = num_heads
    hd = C // H
    scale = hd ** -0.5

    # Head-group size: largest divisor of H with G*hd <= 128 (G*hd == 128 when
    # possible, e.g. G=2 for hd=64 ViT, G=8 for the hd=16 toy config).
    target = max(1, 128 // hd)
    G = 1
    for d in range(1, H + 1):
        if H % d == 0 and d <= target:
            G = d
    NG = H // G
    Ghd = G * hd

    # One-time host-side weight prep: transpose, fold the softmax scale into
    # the Q columns, split into per-group fused [Wq | Wk | Wv] slabs.
    wt = jnp.asarray(w_qkv).T                       # (C, 3C): [q | k | v] cols
    wq = (wt[:, :C] * scale).astype(compute_dtype)
    wk = wt[:, C:2 * C].astype(compute_dtype)
    wv = wt[:, 2 * C:].astype(compute_dtype)

    def grp(w):                                     # (C, C) -> (NG, C, Ghd)
        return w.reshape(C, NG, Ghd).transpose(1, 0, 2)

    w_qkv_g = jnp.concatenate([grp(wq), grp(wk), grp(wv)], axis=-1)  # (NG,C,3Ghd)
    w_proj_g = jnp.asarray(w_proj).T.reshape(NG, Ghd, C).astype(compute_dtype)

    x_c = x.astype(compute_dtype)
    b2 = jnp.asarray(b_proj).reshape(1, C).astype(jnp.float32)

    kernel = _make_attention_kernel(N, C, G, hd)

    # TODO(synk): for very long sequences (N >= ~2048) tile the query dim
    # flash-style (online softmax over K/V chunks) so the per-group (N, N)
    # score tensor stays bounded, and add a query-tile "parallel" grid axis so
    # both v7x TensorCores are busy even at B=1.
    return pl.pallas_call(
        kernel,
        out_shape=jax.ShapeDtypeStruct((B, N, C), x.dtype),
        grid_spec=pltpu.PrefetchScalarGridSpec(
            num_scalar_prefetch=0,
            grid=(B, NG),                           # group (reduction) axis last
            in_specs=[
                pl.BlockSpec((1, N, C), lambda b, g: (b, 0, 0)),          # x
                # Weights: full-extent blocks + constant index_map -> fetched
                # once, VMEM-resident for the whole grid, indexed by group id
                # inside the kernel.
                pl.BlockSpec((NG, C, 3 * Ghd), lambda b, g: (0, 0, 0)),   # Wqkv
                pl.BlockSpec((NG, Ghd, C), lambda b, g: (0, 0, 0)),       # Wproj
                pl.BlockSpec((1, C), lambda b, g: (0, 0)),                # bias
            ],
            out_specs=pl.BlockSpec((1, N, C), lambda b, g: (b, 0, 0)),
            scratch_shapes=[pltpu.VMEM((N, C), jnp.float32)],
        ),
        compiler_params=pltpu.CompilerParams(
            dimension_semantics=("parallel", "arbitrary"),
            vmem_limit_bytes=48 * 1024 * 1024,      # <= v7x 64 MiB physical
        ),
    )(x_c, w_qkv_g, w_proj_g, b2)


def reference_forward(x, w_qkv, w_proj, b_proj, num_heads):
    """Pure-JAX f32 mirror of the PyTorch module (eval mode)."""
    B, N, C = x.shape
    hd = C // num_heads
    scale = hd ** -0.5
    qkv = x @ w_qkv.T
    qkv = qkv.reshape(B, N, 3, num_heads, hd).transpose(2, 0, 3, 1, 4)
    q, k, v = qkv[0] * scale, qkv[1], qkv[2]
    attn = jax.nn.softmax(q @ jnp.swapaxes(k, -2, -1), axis=-1)
    y = (attn @ v).transpose(0, 2, 1, 3).reshape(B, N, C)
    return y @ w_proj.T + b_proj


if __name__ == "__main__":
    B, N, C, H = 2, 16, 128, 8    # lane-dense C (>=128), head_dim = 16

    key = jax.random.PRNGKey(0)
    k1, k2, k3, k4 = jax.random.split(key, 4)
    x = jax.random.normal(k1, (B, N, C), jnp.float32)
    # PyTorch nn.Linear weight layout is (out_features, in_features).
    w_qkv = jax.random.normal(k2, (3 * C, C), jnp.float32) * 0.02  # qkv_bias=False
    w_proj = jax.random.normal(k3, (C, C), jnp.float32) * 0.02
    b_proj = jax.random.normal(k4, (C,), jnp.float32) * 0.02

    out = attention_forward(x, w_qkv, w_proj, b_proj, H)
    out = jax.block_until_ready(out)

    ref = reference_forward(x, w_qkv, w_proj, b_proj, H)
    assert out.shape == (B, N, C)
    # bf16 MXU operands + approx reciprocal -> loosened tolerance vs f32 ref.
    assert jnp.allclose(out, ref, atol=1e-2, rtol=1e-2), "mismatch vs reference"

    print("KERNEL_OK")
</pallas_src>

<mosaic_0001>
module attributes {stable_mosaic.version = 11 : i64} {
  func.func @kernel(%arg0: i32, %arg1: i32, %arg2: memref<1x16x128xbf16, #tpu.memory_space<vmem>>, %arg3: memref<1x128x384xbf16, #tpu.memory_space<vmem>>, %arg4: memref<1x128x128xbf16, #tpu.memory_space<vmem>>, %arg5: memref<1x128xf32, #tpu.memory_space<vmem>>, %arg6: memref<1x16x128xf32, #tpu.memory_space<vmem>>, %arg7: memref<16x128xf32, #tpu.memory_space<vmem>>) attributes {dimension_semantics = [#tpu.dimension_semantics<parallel>, #tpu.dimension_semantics<arbitrary>], iteration_bounds = array<i64: 2, 1>, scalar_prefetch = 0 : i64, scratch_operands = 1 : i64, tpu.core_type = #tpu.core_type<tc>, window_params = [{transform_indices = @transform_0, window_bounds = array<i64: 1, 16, 128>}, {pipeline_mode = #tpu.pipeline_mode<synchronous>, transform_indices = @transform_1, window_bounds = array<i64: 1, 128, 384>}, {pipeline_mode = #tpu.pipeline_mode<synchronous>, transform_indices = @transform_2, window_bounds = array<i64: 1, 128, 128>}, {pipeline_mode = #tpu.pipeline_mode<synchronous>, transform_indices = @transform_3, window_bounds = array<i64: 1, 128>}, {transform_indices = @transform_4, window_bounds = array<i64: 1, 16, 128>}]} {
    %c0_i32 = arith.constant 0 : i32
    %0 = arith.cmpi eq, %arg1, %c0_i32 : i32
    %1 = arith.extui %0 : i1 to i32
    %c0_i32_0 = arith.constant 0 : i32
    %2 = arith.cmpi ne, %1, %c0_i32_0 : i32
    scf.if %2 {
      %c0_46 = arith.constant 0 : index
      %c0_47 = arith.constant 0 : index
      %180 = vector.load %arg5[%c0_46, %c0_47] : memref<1x128xf32, #tpu.memory_space<vmem>>, vector<1x128xf32>
      %181 = vector.shape_cast %180 : vector<1x128xf32> to vector<1x128xf32>
      %182 = vector.broadcast %181 : vector<1x128xf32> to vector<16x128xf32>
      %c0_48 = arith.constant 0 : index
      %c0_49 = arith.constant 0 : index
      %183 = vector.load %arg7[%c0_48, %c0_49] : memref<16x128xf32, #tpu.memory_space<vmem>>, vector<16x128xf32>
      tpu.vector_store %arg7[%c0_48, %c0_49], %182 {strides = array<i32>} : memref<16x128xf32, #tpu.memory_space<vmem>>, vector<16x128xf32>,
    } else {
    }
    %c0 = arith.constant 0 : index
    %c0_1 = arith.constant 0 : index
    %c0_2 = arith.constant 0 : index
    %3 = vector.load %arg2[%c0, %c0_1, %c0_2] : memref<1x16x128xbf16, #tpu.memory_space<vmem>>, vector<1x16x128xbf16>
    %4 = vector.shape_cast %3 : vector<1x16x128xbf16> to vector<16x128xbf16>
    %5 = arith.index_cast %arg1 : i32 to index
    %c0_3 = arith.constant 0 : index
    %c0_4 = arith.constant 0 : index
    %6 = vector.load %arg3[%5, %c0_3, %c0_4] : memref<1x128x384xbf16, #tpu.memory_space<vmem>>, vector<1x128x384xbf16>
    %7 = vector.shape_cast %6 : vector<1x128x384xbf16> to vector<128x384xbf16>
    %8 = arith.index_cast %arg1 : i32 to index
    %c0_5 = arith.constant 0 : index
    %c0_6 = arith.constant 0 : index
    %9 = vector.load %arg4[%8, %c0_5, %c0_6] : memref<1x128x128xbf16, #tpu.memory_space<vmem>>, vector<1x128x128xbf16>
    %10 = vector.shape_cast %9 : vector<1x128x128xbf16> to vector<128x128xbf16>
    %cst = arith.constant dense<0.000000e+00> : vector<16x384xf32>
    %11 = tpu.matmul %4, %7, %cst {dimension_numbers = #tpu.dot_dimension_numbers<[1], [0], [0], [1], [0, 0, 1, 1], [], []>} : vector<16x128xbf16>, vector<128x384xbf16>, vector<16x384xf32> -> vector<16x384xf32>
    %12 = vector.extract_strided_slice %11 {offsets = [0, 0], sizes = [16, 16], strides = [1, 1]} : vector<16x384xf32> to vector<16x16xf32>
    %13 = arith.truncf %12 : vector<16x16xf32> to vector<16x16xbf16>
    %14 = vector.extract_strided_slice %11 {offsets = [0, 128], sizes = [16, 16], strides = [1, 1]} : vector<16x384xf32> to vector<16x16xf32>
    %15 = arith.truncf %14 : vector<16x16xf32> to vector<16x16xbf16>
    %16 = vector.extract_strided_slice %11 {offsets = [0, 256], sizes = [16, 16], strides = [1, 1]} : vector<16x384xf32> to vector<16x16xf32>
    %17 = arith.truncf %16 : vector<16x16xf32> to vector<16x16xbf16>
    %cst_7 = arith.constant dense<0.000000e+00> : vector<16x16xf32>
    %18 = tpu.matmul %13, %15, %cst_7 {dimension_numbers = #tpu.dot_dimension_numbers<[1], [1], [0], [0], [0, 0, 1, 0], [], []>} : vector<16x16xbf16>, vector<16x16xbf16>, vector<16x16xf32> -> vector<16x16xf32>
    %cst_8 = arith.constant dense<0xFF800000> : vector<16xf32>
    %19 = vector.multi_reduction <maximumf>, %18, %cst_8 [1] : vector<16x16xf32> to vector<16xf32>
    %20 = vector.shape_cast %19 : vector<16xf32> to vector<16x1xf32>
    %21 = vector.broadcast %20 : vector<16x1xf32> to vector<16x16xf32>
    %22 = arith.subf %18, %21 : vector<16x16xf32>
    %23 = math.exp %22 : vector<16x16xf32>
    %cst_9 = arith.constant dense<0.000000e+00> : vector<16xf32>
    %24 = vector.multi_reduction <add>, %23, %cst_9 [1] : vector<16x16xf32> to vector<16xf32>
    %25 = vector.shape_cast %24 : vector<16xf32> to vector<16x1xf32>
    %26 = arith.truncf %23 : vector<16x16xf32> to vector<16x16xbf16>
    %cst_10 = arith.constant dense<0.000000e+00> : vector<16x16xf32>
    %27 = tpu.matmul %26, %17, %cst_10 {dimension_numbers = #tpu.dot_dimension_numbers<[1], [0], [0], [1], [0, 0, 1, 1], [], []>} : vector<16x16xbf16>, vector<16x16xbf16>, vector<16x16xf32> -> vector<16x16xf32>
    %28 = tpu.reciprocal %25 {approx = true} : vector<16x1xf32> -> vector<16x1xf32>
    %29 = vector.broadcast %28 : vector<16x1xf32> to vector<16x16xf32>
    %30 = arith.mulf %27, %29 : vector<16x16xf32>
    %31 = arith.truncf %30 : vector<16x16xf32> to vector<16x16xbf16>
    %32 = vector.extract_strided_slice %11 {offsets = [0, 16], sizes = [16, 16], strides = [1, 1]} : vector<16x384xf32> to vector<16x16xf32>
    %33 = arith.truncf %32 : vector<16x16xf32> to vector<16x16xbf16>
    %34 = vector.extract_strided_slice %11 {offsets = [0, 144], sizes = [16, 16], strides = [1, 1]} : vector<16x384xf32> to vector<16x16xf32>
    %35 = arith.truncf %34 : vector<16x16xf32> to vector<16x16xbf16>
    %36 = vector.extract_strided_slice %11 {offsets = [0, 272], sizes = [16, 16], strides = [1, 1]} : vector<16x384xf32> to vector<16x16xf32>
    %37 = arith.truncf %36 : vector<16x16xf32> to vector<16x16xbf16>
    %cst_11 = arith.constant dense<0.000000e+00> : vector<16x16xf32>
    %38 = tpu.matmul %33, %35, %cst_11 {dimension_numbers = #tpu.dot_dimension_numbers<[1], [1], [0], [0], [0, 0, 1, 0], [], []>} : vector<16x16xbf16>, vector<16x16xbf16>, vector<16x16xf32> -> vector<16x16xf32>
    %cst_12 = arith.constant dense<0xFF800000> : vector<16xf32>
    %39 = vector.multi_reduction <maximumf>, %38, %cst_12 [1] : vector<16x16xf32> to vector<16xf32>
    %40 = vector.shape_cast %39 : vector<16xf32> to vector<16x1xf32>
    %41 = vector.broadcast %40 : vector<16x1xf32> to vector<16x16xf32>
    %42 = arith.subf %38, %41 : vector<16x16xf32>
    %43 = math.exp %42 : vector<16x16xf32>
    %cst_13 = arith.constant dense<0.000000e+00> : vector<16xf32>
    %44 = vector.multi_reduction <add>, %43, %cst_13 [1] : vector<16x16xf32> to vector<16xf32>
    %45 = vector.shape_cast %44 : vector<16xf32> to vector<16x1xf32>
    %46 = arith.truncf %43 : vector<16x16xf32> to vector<16x16xbf16>
    %cst_14 = arith.constant dense<0.000000e+00> : vector<16x16xf32>
    %47 = tpu.matmul %46, %37, %cst_14 {dimension_numbers = #tpu.dot_dimension_numbers<[1], [0], [0], [1], [0, 0, 1, 1], [], []>} : vector<16x16xbf16>, vector<16x16xbf16>, vector<16x16xf32> -> vector<16x16xf32>
    %48 = tpu.reciprocal %45 {approx = true} : vector<16x1xf32> -> vector<16x1xf32>
    %49 = vector.broadcast %48 : vector<16x1xf32> to vector<16x16xf32>
    %50 = arith.mulf %47, %49 : vector<16x16xf32>
    %51 = arith.truncf %50 : vector<16x16xf32> to vector<16x16xbf16>
    %52 = vector.extract_strided_slice %11 {offsets = [0, 32], sizes = [16, 16], strides = [1, 1]} : vector<16x384xf32> to vector<16x16xf32>
    %53 = arith.truncf %52 : vector<16x16xf32> to vector<16x16xbf16>
    %54 = vector.extract_strided_slice %11 {offsets = [0, 160], sizes = [16, 16], strides = [1, 1]} : vector<16x384xf32> to vector<16x16xf32>
    %55 = arith.truncf %54 : vector<16x16xf32> to vector<16x16xbf16>
    %56 = vector.extract_strided_slice %11 {offsets = [0, 288], sizes = [16, 16], strides = [1, 1]} : vector<16x384xf32> to vector<16x16xf32>
    %57 = arith.truncf %56 : vector<16x16xf32> to vector<16x16xbf16>
    %cst_15 = arith.constant dense<0.000000e+00> : vector<16x16xf32>
    %58 = tpu.matmul %53, %55, %cst_15 {dimension_numbers = #tpu.dot_dimension_numbers<[1], [1], [0], [0], [0, 0, 1, 0], [], []>} : vector<16x16xbf16>, vector<16x16xbf16>, vector<16x16xf32> -> vector<16x16xf32>
    %cst_16 = arith.constant dense<0xFF800000> : vector<16xf32>
    %59 = vector.multi_reduction <maximumf>, %58, %cst_16 [1] : vector<16x16xf32> to vector<16xf32>
    %60 = vector.shape_cast %59 : vector<16xf32> to vector<16x1xf32>
    %61 = vector.broadcast %60 : vector<16x1xf32> to vector<16x16xf32>
    %62 = arith.subf %58, %61 : vector<16x16xf32>
    %63 = math.exp %62 : vector<16x16xf32>
    %cst_17 = arith.constant dense<0.000000e+00> : vector<16xf32>
    %64 = vector.multi_reduction <add>, %63, %cst_17 [1] : vector<16x16xf32> to vector<16xf32>
    %65 = vector.shape_cast %64 : vector<16xf32> to vector<16x1xf32>
    %66 = arith.truncf %63 : vector<16x16xf32> to vector<16x16xbf16>
    %cst_18 = arith.constant dense<0.000000e+00> : vector<16x16xf32>
    %67 = tpu.matmul %66, %57, %cst_18 {dimension_numbers = #tpu.dot_dimension_numbers<[1], [0], [0], [1], [0, 0, 1, 1], [], []>} : vector<16x16xbf16>, vector<16x16xbf16>, vector<16x16xf32> -> vector<16x16xf32>
    %68 = tpu.reciprocal %65 {approx = true} : vector<16x1xf32> -> vector<16x1xf32>
    %69 = vector.broadcast %68 : vector<16x1xf32> to vector<16x16xf32>
    %70 = arith.mulf %67, %69 : vector<16x16xf32>
    %71 = arith.truncf %70 : vector<16x16xf32> to vector<16x16xbf16>
    %72 = vector.extract_strided_slice %11 {offsets = [0, 48], sizes = [16, 16], strides = [1, 1]} : vector<16x384xf32> to vector<16x16xf32>
    %73 = arith.truncf %72 : vector<16x16xf32> to vector<16x16xbf16>
    %74 = vector.extract_strided_slice %11 {offsets = [0, 176], sizes = [16, 16], strides = [1, 1]} : vector<16x384xf32> to vector<16x16xf32>
    %75 = arith.truncf %74 : vector<16x16xf32> to vector<16x16xbf16>
    %76 = vector.extract_strided_slice %11 {offsets = [0, 304], sizes = [16, 16], strides = [1, 1]} : vector<16x384xf32> to vector<16x16xf32>
    %77 = arith.truncf %76 : vector<16x16xf32> to vector<16x16xbf16>
    %cst_19 = arith.constant dense<0.000000e+00> : vector<16x16xf32>
    %78 = tpu.matmul %73, %75, %cst_19 {dimension_numbers = #tpu.dot_dimension_numbers<[1], [1], [0], [0], [0, 0, 1, 0], [], []>} : vector<16x16xbf16>, vector<16x16xbf16>, vector<16x16xf32> -> vector<16x16xf32>
    %cst_20 = arith.constant dense<0xFF800000> : vector<16xf32>
    %79 = vector.multi_reduction <maximumf>, %78, %cst_20 [1] : vector<16x16xf32> to vector<16xf32>
    %80 = vector.shape_cast %79 : vector<16xf32> to vector<16x1xf32>
    %81 = vector.broadcast %80 : vector<16x1xf32> to vector<16x16xf32>
    %82 = arith.subf %78, %81 : vector<16x16xf32>
    %83 = math.exp %82 : vector<16x16xf32>
    %cst_21 = arith.constant dense<0.000000e+00> : vector<16xf32>
    %84 = vector.multi_reduction <add>, %83, %cst_21 [1] : vector<16x16xf32> to vector<16xf32>
    %85 = vector.shape_cast %84 : vector<16xf32> to vector<16x1xf32>
    %86 = arith.truncf %83 : vector<16x16xf32> to vector<16x16xbf16>
    %cst_22 = arith.constant dense<0.000000e+00> : vector<16x16xf32>
    %87 = tpu.matmul %86, %77, %cst_22 {dimension_numbers = #tpu.dot_dimension_numbers<[1], [0], [0], [1], [0, 0, 1, 1], [], []>} : vector<16x16xbf16>, vector<16x16xbf16>, vector<16x16xf32> -> vector<16x16xf32>
    %88 = tpu.reciprocal %85 {approx = true} : vector<16x1xf32> -> vector<16x1xf32>
    %89 = vector.broadcast %88 : vector<16x1xf32> to vector<16x16xf32>
    %90 = arith.mulf %87, %89 : vector<16x16xf32>
    %91 = arith.truncf %90 : vector<16x16xf32> to vector<16x16xbf16>
    %92 = vector.extract_strided_slice %11 {offsets = [0, 64], sizes = [16, 16], strides = [1, 1]} : vector<16x384xf32> to vector<16x16xf32>
    %93 = arith.truncf %92 : vector<16x16xf32> to vector<16x16xbf16>
    %94 = vector.extract_strided_slice %11 {offsets = [0, 192], sizes = [16, 16], strides = [1, 1]} : vector<16x384xf32> to vector<16x16xf32>
    %95 = arith.truncf %94 : vector<16x16xf32> to vector<16x16xbf16>
    %96 = vector.extract_strided_slice %11 {offsets = [0, 320], sizes = [16, 16], strides = [1, 1]} : vector<16x384xf32> to vector<16x16xf32>
    %97 = arith.truncf %96 : vector<16x16xf32> to vector<16x16xbf16>
    %cst_23 = arith.constant dense<0.000000e+00> : vector<16x16xf32>
    %98 = tpu.matmul %93, %95, %cst_23 {dimension_numbers = #tpu.dot_dimension_numbers<[1], [1], [0], [0], [0, 0, 1, 0], [], []>} : vector<16x16xbf16>, vector<16x16xbf16>, vector<16x16xf32> -> vector<16x16xf32>
    %cst_24 = arith.constant dense<0xFF800000> : vector<16xf32>
    %99 = vector.multi_reduction <maximumf>, %98, %cst_24 [1] : vector<16x16xf32> to vector<16xf32>
    %100 = vector.shape_cast %99 : vector<16xf32> to vector<16x1xf32>
    %101 = vector.broadcast %100 : vector<16x1xf32> to vector<16x16xf32>
    %102 = arith.subf %98, %101 : vector<16x16xf32>
    %103 = math.exp %102 : vector<16x16xf32>
    %cst_25 = arith.constant dense<0.000000e+00> : vector<16xf32>
    %104 = vector.multi_reduction <add>, %103, %cst_25 [1] : vector<16x16xf32> to vector<16xf32>
    %105 = vector.shape_cast %104 : vector<16xf32> to vector<16x1xf32>
    %106 = arith.truncf %103 : vector<16x16xf32> to vector<16x16xbf16>
    %cst_26 = arith.constant dense<0.000000e+00> : vector<16x16xf32>
    %107 = tpu.matmul %106, %97, %cst_26 {dimension_numbers = #tpu.dot_dimension_numbers<[1], [0], [0], [1], [0, 0, 1, 1], [], []>} : vector<16x16xbf16>, vector<16x16xbf16>, vector<16x16xf32> -> vector<16x16xf32>
    %108 = tpu.reciprocal %105 {approx = true} : vector<16x1xf32> -> vector<16x1xf32>
    %109 = vector.broadcast %108 : vector<16x1xf32> to vector<16x16xf32>
    %110 = arith.mulf %107, %109 : vector<16x16xf32>
    %111 = arith.truncf %110 : vector<16x16xf32> to vector<16x16xbf16>
    %112 = vector.extract_strided_slice %11 {offsets = [0, 80], sizes = [16, 16], strides = [1, 1]} : vector<16x384xf32> to vector<16x16xf32>
    %113 = arith.truncf %112 : vector<16x16xf32> to vector<16x16xbf16>
    %114 = vector.extract_strided_slice %11 {offsets = [0, 208], sizes = [16, 16], strides = [1, 1]} : vector<16x384xf32> to vector<16x16xf32>
    %115 = arith.truncf %114 : vector<16x16xf32> to vector<16x16xbf16>
    %116 = vector.extract_strided_slice %11 {offsets = [0, 336], sizes = [16, 16], strides = [1, 1]} : vector<16x384xf32> to vector<16x16xf32>
    %117 = arith.truncf %116 : vector<16x16xf32> to vector<16x16xbf16>
    %cst_27 = arith.constant dense<0.000000e+00> : vector<16x16xf32>
    %118 = tpu.matmul %113, %115, %cst_27 {dimension_numbers = #tpu.dot_dimension_numbers<[1], [1], [0], [0], [0, 0, 1, 0], [], []>} : vector<16x16xbf16>, vector<16x16xbf16>, vector<16x16xf32> -> vector<16x16xf32>
    %cst_28 = arith.constant dense<0xFF800000> : vector<16xf32>
    %119 = vector.multi_reduction <maximumf>, %118, %cst_28 [1] : vector<16x16xf32> to vector<16xf32>
    %120 = vector.shape_cast %119 : vector<16xf32> to vector<16x1xf32>
    %121 = vector.broadcast %120 : vector<16x1xf32> to vector<16x16xf32>
    %122 = arith.subf %118, %121 : vector<16x16xf32>
    %123 = math.exp %122 : vector<16x16xf32>
    %cst_29 = arith.constant dense<0.000000e+00> : vector<16xf32>
    %124 = vector.multi_reduction <add>, %123, %cst_29 [1] : vector<16x16xf32> to vector<16xf32>
    %125 = vector.shape_cast %124 : vector<16xf32> to vector<16x1xf32>
    %126 = arith.truncf %123 : vector<16x16xf32> to vector<16x16xbf16>
    %cst_30 = arith.constant dense<0.000000e+00> : vector<16x16xf32>
    %127 = tpu.matmul %126, %117, %cst_30 {dimension_numbers = #tpu.dot_dimension_numbers<[1], [0], [0], [1], [0, 0, 1, 1], [], []>} : vector<16x16xbf16>, vector<16x16xbf16>, vector<16x16xf32> -> vector<16x16xf32>
    %128 = tpu.reciprocal %125 {approx = true} : vector<16x1xf32> -> vector<16x1xf32>
    %129 = vector.broadcast %128 : vector<16x1xf32> to vector<16x16xf32>
    %130 = arith.mulf %127, %129 : vector<16x16xf32>
    %131 = arith.truncf %130 : vector<16x16xf32> to vector<16x16xbf16>
    %132 = vector.extract_strided_slice %11 {offsets = [0, 96], sizes = [16, 16], strides = [1, 1]} : vector<16x384xf32> to vector<16x16xf32>
    %133 = arith.truncf %132 : vector<16x16xf32> to vector<16x16xbf16>
    %134 = vector.extract_strided_slice %11 {offsets = [0, 224], sizes = [16, 16], strides = [1, 1]} : vector<16x384xf32> to vector<16x16xf32>
    %135 = arith.truncf %134 : vector<16x16xf32> to vector<16x16xbf16>
    %136 = vector.extract_strided_slice %11 {offsets = [0, 352], sizes = [16, 16], strides = [1, 1]} : vector<16x384xf32> to vector<16x16xf32>
    %137 = arith.truncf %136 : vector<16x16xf32> to vector<16x16xbf16>
    %cst_31 = arith.constant dense<0.000000e+00> : vector<16x16xf32>
    %138 = tpu.matmul %133, %135, %cst_31 {dimension_numbers = #tpu.dot_dimension_numbers<[1], [1], [0], [0], [0, 0, 1, 0], [], []>} : vector<16x16xbf16>, vector<16x16xbf16>, vector<16x16xf32> -> vector<16x16xf32>
    %cst_32 = arith.constant dense<0xFF800000> : vector<16xf32>
    %139 = vector.multi_reduction <maximumf>, %138, %cst_32 [1] : vector<16x16xf32> to vector<16xf32>
    %140 = vector.shape_cast %139 : vector<16xf32> to vector<16x1xf32>
    %141 = vector.broadcast %140 : vector<16x1xf32> to vector<16x16xf32>
    %142 = arith.subf %138, %141 : vector<16x16xf32>
    %143 = math.exp %142 : vector<16x16xf32>
    %cst_33 = arith.constant dense<0.000000e+00> : vector<16xf32>
    %144 = vector.multi_reduction <add>, %143, %cst_33 [1] : vector<16x16xf32> to vector<16xf32>
    %145 = vector.shape_cast %144 : vector<16xf32> to vector<16x1xf32>
    %146 = arith.truncf %143 : vector<16x16xf32> to vector<16x16xbf16>
    %cst_34 = arith.constant dense<0.000000e+00> : vector<16x16xf32>
    %147 = tpu.matmul %146, %137, %cst_34 {dimension_numbers = #tpu.dot_dimension_numbers<[1], [0], [0], [1], [0, 0, 1, 1], [], []>} : vector<16x16xbf16>, vector<16x16xbf16>, vector<16x16xf32> -> vector<16x16xf32>
    %148 = tpu.reciprocal %145 {approx = true} : vector<16x1xf32> -> vector<16x1xf32>
    %149 = vector.broadcast %148 : vector<16x1xf32> to vector<16x16xf32>
    %150 = arith.mulf %147, %149 : vector<16x16xf32>
    %151 = arith.truncf %150 : vector<16x16xf32> to vector<16x16xbf16>
    %152 = vector.extract_strided_slice %11 {offsets = [0, 112], sizes = [16, 16], strides = [1, 1]} : vector<16x384xf32> to vector<16x16xf32>
    %153 = arith.truncf %152 : vector<16x16xf32> to vector<16x16xbf16>
    %154 = vector.extract_strided_slice %11 {offsets = [0, 240], sizes = [16, 16], strides = [1, 1]} : vector<16x384xf32> to vector<16x16xf32>
    %155 = arith.truncf %154 : vector<16x16xf32> to vector<16x16xbf16>
    %156 = vector.extract_strided_slice %11 {offsets = [0, 368], sizes = [16, 16], strides = [1, 1]} : vector<16x384xf32> to vector<16x16xf32>
    %157 = arith.truncf %156 : vector<16x16xf32> to vector<16x16xbf16>
    %cst_35 = arith.constant dense<0.000000e+00> : vector<16x16xf32>
    %158 = tpu.matmul %153, %155, %cst_35 {dimension_numbers = #tpu.dot_dimension_numbers<[1], [1], [0], [0], [0, 0, 1, 0], [], []>} : vector<16x16xbf16>, vector<16x16xbf16>, vector<16x16xf32> -> vector<16x16xf32>
    %cst_36 = arith.constant dense<0xFF800000> : vector<16xf32>
    %159 = vector.multi_reduction <maximumf>, %158, %cst_36 [1] : vector<16x16xf32> to vector<16xf32>
    %160 = vector.shape_cast %159 : vector<16xf32> to vector<16x1xf32>
    %161 = vector.broadcast %160 : vector<16x1xf32> to vector<16x16xf32>
    %162 = arith.subf %158, %161 : vector<16x16xf32>
    %163 = math.exp %162 : vector<16x16xf32>
    %cst_37 = arith.constant dense<0.000000e+00> : vector<16xf32>
    %164 = vector.multi_reduction <add>, %163, %cst_37 [1] : vector<16x16xf32> to vector<16xf32>
    %165 = vector.shape_cast %164 : vector<16xf32> to vector<16x1xf32>
    %166 = arith.truncf %163 : vector<16x16xf32> to vector<16x16xbf16>
    %cst_38 = arith.constant dense<0.000000e+00> : vector<16x16xf32>
    %167 = tpu.matmul %166, %157, %cst_38 {dimension_numbers = #tpu.dot_dimension_numbers<[1], [0], [0], [1], [0, 0, 1, 1], [], []>} : vector<16x16xbf16>, vector<16x16xbf16>, vector<16x16xf32> -> vector<16x16xf32>
    %168 = tpu.reciprocal %165 {approx = true} : vector<16x1xf32> -> vector<16x1xf32>
    %169 = vector.broadcast %168 : vector<16x1xf32> to vector<16x16xf32>
    %170 = arith.mulf %167, %169 : vector<16x16xf32>
    %171 = arith.truncf %170 : vector<16x16xf32> to vector<16x16xbf16>
    %172 = tpu.concatenate %31, %51, %71, %91, %111, %131, %151, %171 in 1 : vector<16x16xbf16>, vector<16x16xbf16>, vector<16x16xbf16>, vector<16x16xbf16>, vector<16x16xbf16>, vector<16x16xbf16>, vector<16x16xbf16>, vector<16x16xbf16> -> vector<16x128xbf16>
    %c0_39 = arith.constant 0 : index
    %c0_40 = arith.constant 0 : index
    %173 = vector.load %arg7[%c0_39, %c0_40] : memref<16x128xf32, #tpu.memory_space<vmem>>, vector<16x128xf32>
    %cst_41 = arith.constant dense<0.000000e+00> : vector<16x128xf32>
    %174 = tpu.matmul %172, %10, %cst_41 {dimension_numbers = #tpu.dot_dimension_numbers<[1], [0], [0], [1], [0, 0, 1, 1], [], []>} : vector<16x128xbf16>, vector<128x128xbf16>, vector<16x128xf32> -> vector<16x128xf32>
    %175 = arith.addf %173, %174 : vector<16x128xf32>
    %c0_42 = arith.constant 0 : index
    %c0_43 = arith.constant 0 : index
    %176 = vector.load %arg7[%c0_42, %c0_43] : memref<16x128xf32, #tpu.memory_space<vmem>>, vector<16x128xf32>
    tpu.vector_store %arg7[%c0_42, %c0_43], %175 {strides = array<i32>} : memref<16x128xf32, #tpu.memory_space<vmem>>, vector<16x128xf32>,
    %c0_i32_44 = arith.constant 0 : i32
    %177 = arith.cmpi eq, %arg1, %c0_i32_44 : i32
    %178 = arith.extui %177 : i1 to i32
    %c0_i32_45 = arith.constant 0 : i32
    %179 = arith.cmpi ne, %178, %c0_i32_45 : i32
    scf.if %179 {
      %c0_46 = arith.constant 0 : index
      %c0_47 = arith.constant 0 : index
      %180 = vector.load %arg7[%c0_46, %c0_47] : memref<16x128xf32, #tpu.memory_space<vmem>>, vector<16x128xf32>
      %c0_48 = arith.constant 0 : index
      %c0_49 = arith.constant 0 : index
      %c0_50 = arith.constant 0 : index
      %181 = vector.load %arg6[%c0_48, %c0_49, %c0_50] : memref<1x16x128xf32, #tpu.memory_space<vmem>>, vector<1x16x128xf32>
      %182 = vector.shape_cast %181 : vector<1x16x128xf32> to vector<16x128xf32>
      %183 = vector.shape_cast %180 : vector<16x128xf32> to vector<1x16x128xf32>
      tpu.vector_store %arg6[%c0_48, %c0_49, %c0_50], %183 {strides = array<i32>} : memref<1x16x128xf32, #tpu.memory_space<vmem>>, vector<1x16x128xf32>,
    } else {
    }
    return
  }
  func.func @transform_0(%arg0: i32, %arg1: i32) -> (i32, i32, i32) {
    %c0_i32 = arith.constant 0 : i32
    %c0_i32_0 = arith.constant 0 : i32
    %c0_i32_1 = arith.constant 0 : i32
    return %arg0, %c0_i32, %c0_i32_0 : i32, i32, i32
  }
  func.func @transform_1(%arg0: i32, %arg1: i32) -> (i32, i32, i32) {
    %c0_i32 = arith.constant 0 : i32
    %c0_i32_0 = arith.constant 0 : i32
    %c0_i32_1 = arith.constant 0 : i32
    %c0_i32_2 = arith.constant 0 : i32
    return %c0_i32, %c0_i32_0, %c0_i32_1 : i32, i32, i32
  }
  func.func @transform_2(%arg0: i32, %arg1: i32) -> (i32, i32, i32) {
    %c0_i32 = arith.constant 0 : i32
    %c0_i32_0 = arith.constant 0 : i32
    %c0_i32_1 = arith.constant 0 : i32
    %c0_i32_2 = arith.constant 0 : i32
    return %c0_i32, %c0_i32_0, %c0_i32_1 : i32, i32, i32
  }
  func.func @transform_3(%arg0: i32, %arg1: i32) -> (i32, i32) {
    %c0_i32 = arith.constant 0 : i32
    %c0_i32_0 = arith.constant 0 : i32
    %c0_i32_1 = arith.constant 0 : i32
    return %c0_i32, %c0_i32_0 : i32, i32
  }
  func.func @transform_4(%arg0: i32, %arg1: i32) -> (i32, i32, i32) {
    %c0_i32 = arith.constant 0 : i32
    %c0_i32_0 = arith.constant 0 : i32
    %c0_i32_1 = arith.constant 0 : i32
    return %arg0, %c0_i32, %c0_i32_0 : i32, i32, i32
  }
}

</mosaic_0001>

<llo_original>
// kernel: tpu_custom_call.1
$region0: #{tpu_custom_call.1}
  #allocation0 [shape = 'u32[]', space=smem, size = 0x4, offset = 0x4, fixed_abs, tag = 'smem constant byte address 0x4 - core index']
  #allocation1 [shape = 'u32[72,128]{1,0:T(1,128)}', space=vmem, size = 0x9000, scoped, tag = 'internal scratch']
  #allocation2 [shape = 'f32[16,128]{1,0:T(8,128)}', space=vmem, size = 0x2000, scoped, tag = 'scratch operand']
  %s0 = inlined_call_operand.hbm [shape: bf16[2,16,128], index: 0, kind: input, shape index: {}]
  %s1 = inlined_call_operand.hbm [shape: bf16[1,128,384], index: 1, kind: input, shape index: {}]
  %s2 = inlined_call_operand.hbm [shape: bf16[1,128,128], index: 2, kind: input, shape index: {}]
  %s3 = inlined_call_operand.vmem [shape: f32[1,128], index: 3, kind: input, shape index: {}]
  %s4 = inlined_call_operand.hbm [shape: f32[2,16,128], index: 4, kind: output, shape index: {}]
  %s5 = sld [smem:[#allocation0]]
  $region69: #{tpu_custom_call.1} parent=0
    _
  %s7 = ssub.s32 1, %s5
  %s8 = scalar_select 0, %s7, %s5
  $region1: #{tpu_custom_call.1} parent=0
    #allocation3 [shape = 'u8[8192]{0}', space=vmem, size = 0x2000, scoped, tag = 'input window, operand 0']
    #allocation4 [shape = 's32[2]{0}', space=sflag, size = 0x8, scoped, tag = 'scoped memory for tpu_custom_call.1']
    #allocation5 [shape = 's32[2]{0}', space=sflag, size = 0x8, scoped, tag = 'scoped memory for tpu_custom_call.1']
    #allocation6 [shape = 'u8[98304]{0}', space=vmem, size = 0x18000, scoped, tag = 'input window, operand 1, single buffered']
    #allocation7 [shape = 's32[1]{0}', space=sflag, size = 0x4, scoped, tag = 'scoped memory for tpu_custom_call.1']
    #allocation8 [shape = 'u8[32768]{0}', space=vmem, size = 0x8000, scoped, tag = 'input window, operand 2, single buffered']
    #allocation9 [shape = 'u8[16384]{0}', space=vmem, size = 0x4000, scoped, tag = 'output window, operand 0']
    %9 = vsyncpa [#allocation4], 0
    %s10 = scalar_lea.sflag [#allocation4], 1
    %11 = vsyncpa %s10, 0
    %12 = vsyncpa [#allocation7], 0
    %13 = vsyncpa [#allocation5], 0
    %s14 = scalar_lea.sflag [#allocation5], 1
    %15 = vsyncpa %s14, 0
    loop: start=0, step=1, limit=4
    $region2: #{tpu_custom_call.1} parent=1 // loop_pre_header
      _
    $region3: #{tpu_custom_call.1} parent=1 // loop_header
      %s17 = sphi 0, %s21
      %p18 = scmp.ge.s32.totalorder %s17, 4
      %s24 = sphi 0, %s36
      %s25 = sphi 0, %s32
      %s26 = sphi 0, %s24
      %s27 = sphi 0, %s25
      %s28 = sphi 0, %s26
      %s29 = sphi 0, %s27
      %s39 = sphi 0, %s41
      %s42 = sphi 0, %s39
      %s43 = sphi 0, %s42
      %s59 = sphi 0, %s43
      %s63 = sphi 0, %s63
      %s65 = sphi 0, %s63
      %s66 = sphi 0, %s65
      %s80 = sphi 0, %s66
      %s84 = sphi 0, %s84
      %s86 = sphi 0, %s84
      %s87 = sphi 0, %s86
      %s101 = sphi 0, %s87
      %s105 = sphi 0, %s105
      %s107 = sphi 0, %s105
      %s108 = sphi 0, %s107
      %s122 = sphi 0, %s108
      %s128 = sphi 0, %s130
      %s131 = sphi 0, %s128
      %s132 = sphi 0, %s131
      %s148 = sphi 0, %s132
    $region4: #{tpu_custom_call.1} parent=1 // loop_header_branch
      %20 = sbr.rel (%p18) target = $region8
    $region5: #{tpu_custom_call.1} parent=1 // loop_body
      %s22 = ssub.s32 %s17, 1
      %s23 = ssub.s32 %s17, 2
      %s30 = sadd.s32 1, %s25
      %p31 = scmp.ge.s32.totalorder %s30, 1
      %s32 = scalar_select %p31, 0, %s30
      %s33 = sadd.s32 1, %s24
      %s34 = scalar_select %p31, %s33, %s24
      %p35 = scmp.ge.s32.totalorder %s34, 2
      %s36 = scalar_select %p35, 0, %s34
      %s37 = ssub.s32 %s24, %s36
      %p38 = scmp.eq.s32.totalorder %s37, 0
      %s40 = sadd.s32 %s39, 1
      %s41 = scalar_select %p38, %s39, %s40
      %p44 = pneg %p38
      %p45 = scmp.eq.s32.totalorder %s17, 1
      %p46 = por %p44, %p45
      %p47 = scmp.ne.s32.totalorder %s39, %s42
      %p48 = scmp.eq.s32.totalorder %s17, 0
      %p49 = por %p47, %p48
      %p50 = scmp.ne.s32.totalorder %s39, %s42
      %p51 = scmp.eq.s32.totalorder %s22, 1
      %p52 = por %p50, %p51
      %p53 = scmp.ne.s32.totalorder %s42, %s43
      %p54 = scmp.eq.s32.totalorder %s22, 0
      %p55 = por %p53, %p54
      %p56 = scmp.ne.s32.totalorder %s42, %s43
      %p57 = scmp.eq.s32.totalorder %s23, 1
      %p58 = por %p56, %p57
      %p60 = scmp.ne.s32.totalorder %s43, %s59
      %p61 = scmp.eq.s32.totalorder %s23, 0
      %p62 = por %p60, %p61
      %s64 = sadd.s32 %s63, 1
      %p67 = scmp.eq.s32.totalorder %s17, 1
      %p68 = scmp.ne.s32.totalorder %s63, %s65
      %p69 = scmp.eq.s32.totalorder %s17, 0
      %p70 = por %p68, %p69
      %p71 = scmp.ne.s32.totalorder %s63, %s65
      %p72 = scmp.eq.s32.totalorder %s22, 1
      %p73 = por %p71, %p72
      %p74 = scmp.ne.s32.totalorder %s65, %s66
      %p75 = scmp.eq.s32.totalorder %s22, 0
      %p76 = por %p74, %p75
      %p77 = scmp.ne.s32.totalorder %s65, %s66
      %p78 = scmp.eq.s32.totalorder %s23, 1
      %p79 = por %p77, %p78
      %p81 = scmp.ne.s32.totalorder %s66, %s80
      %p82 = scmp.eq.s32.totalorder %s23, 0
      %p83 = por %p81, %p82
      %s85 = sadd.s32 %s84, 1
      %p88 = scmp.eq.s32.totalorder %s17, 1
      %p89 = scmp.ne.s32.totalorder %s84, %s86
      %p90 = scmp.eq.s32.totalorder %s17, 0
      %p91 = por %p89, %p90
      %p92 = scmp.ne.s32.totalorder %s84, %s86
      %p93 = scmp.eq.s32.totalorder %s22, 1
      %p94 = por %p92, %p93
      %p95 = scmp.ne.s32.totalorder %s86, %s87
      %p96 = scmp.eq.s32.totalorder %s22, 0
      %p97 = por %p95, %p96
      %p98 = scmp.ne.s32.totalorder %s86, %s87
      %p99 = scmp.eq.s32.totalorder %s23, 1
      %p100 = por %p98, %p99
      %p102 = scmp.ne.s32.totalorder %s87, %s101
      %p103 = scmp.eq.s32.totalorder %s23, 0
      %p104 = por %p102, %p103
      %s106 = sadd.s32 %s105, 1
      %p109 = scmp.eq.s32.totalorder %s17, 1
      %p110 = scmp.ne.s32.totalorder %s105, %s107
      %p111 = scmp.eq.s32.totalorder %s17, 0
      %p112 = por %p110, %p111
      %p113 = scmp.ne.s32.totalorder %s105, %s107
      %p114 = scmp.eq.s32.totalorder %s22, 1
      %p115 = por %p113, %p114
      %p116 = scmp.ne.s32.totalorder %s107, %s108
      %p117 = scmp.eq.s32.totalorder %s22, 0
      %p118 = por %p116, %p117
      %p119 = scmp.ne.s32.totalorder %s107, %s108
      %p120 = scmp.eq.s32.totalorder %s23, 1
      %p121 = por %p119, %p120
      %p123 = scmp.ne.s32.totalorder %s108, %s122
      %p124 = scmp.eq.s32.totalorder %s23, 0
      %p125 = por %p123, %p124
      %s126 = ssub.s32 %s24, %s36
      %p127 = scmp.eq.s32.totalorder %s126, 0
      %s129 = sadd.s32 %s128, 1
      %s130 = scalar_select %p127, %s128, %s129
      %p133 = pneg %p127
      %p134 = scmp.eq.s32.totalorder %s17, 1
      %p135 = por %p133, %p134
      %p136 = scmp.ne.s32.totalorder %s128, %s131
      %p137 = scmp.eq.s32.totalorder %s17, 0
      %p138 = por %p136, %p137
      %p139 = scmp.ne.s32.totalorder %s128, %s131
      %p140 = scmp.eq.s32.totalorder %s22, 1
      %p141 = por %p139, %p140
      %p142 = scmp.ne.s32.totalorder %s131, %s132
      %p143 = scmp.eq.s32.totalorder %s22, 0
      %p144 = por %p142, %p143
      %p145 = scmp.ne.s32.totalorder %s131, %s132
      %p146 = scmp.eq.s32.totalorder %s23, 1
      %p147 = por %p145, %p146
      %p149 = scmp.ne.s32.totalorder %s132, %s148
      %p150 = scmp.eq.s32.totalorder %s23, 0
      %p151 = por %p149, %p150
      %p152 = scmp.le.s32.totalorder 1, %s17
      %p153 = scmp.lt.s32.totalorder %s17, 3
      %p154 = pnand %p152, %p153
      %p155 = pneg %p154
      // Predicated region
      $region9: #{tpu_custom_call.1} parent=5 // pred_check
        _
      $region10: #{tpu_custom_call.1} parent=5 // pred_check_branch
        %157 = sbr.rel (%p154) target = $region12
      $region11: #{tpu_custom_call.1} parent=5 // pred_region
        %s158 = ssub.s32 %s17, 1
        // Predicated region
        $region13: #{tpu_custom_call.1} parent=11 // pred_check
          %p159 = pneg %p76
        $region14: #{tpu_custom_call.1} parent=11 // pred_check_branch
          %161 = sbr.rel (%p159) target = $region16
        $region15: #{tpu_custom_call.1} parent=11 // pred_region
          %163 = vsyncadd [#allocation7], 0
          %s164 = sshll.u32 %s1, 4
          %s165 = int_to_ptr.hbm [resolvable:$true] %s164
          %s166 = sshll.u32 [#allocation6], 4
          %s167 = int_to_ptr.vmem [resolvable:$true] %s166
          %172 = dma.hbm_to_vmem [thread:$0]  %s165, 3072, %s167, [#allocation7], 192, 192, 12
        $region16: #{tpu_custom_call.1} parent=11 // pred_fallthru
          _
        // Predicated region
        $region17: #{tpu_custom_call.1} parent=11 // pred_check
          %p173 = pneg %p97
        $region18: #{tpu_custom_call.1} parent=11 // pred_check_branch
          %175 = sbr.rel (%p173) target = $region20
        $region19: #{tpu_custom_call.1} parent=11 // pred_region
          %177 = vsyncadd [#allocation7], 0
          %s178 = sshll.u32 %s2, 4
          %s179 = int_to_ptr.hbm [resolvable:$true] %s178
          %s180 = sshll.u32 [#allocation8], 4
          %s181 = int_to_ptr.vmem [resolvable:$true] %s180
          %186 = dma.hbm_to_vmem [thread:$0]  %s179, 1024, %s181, [#allocation7], 64, 64, 4
        $region20: #{tpu_custom_call.1} parent=11 // pred_fallthru
          _
        // Predicated region
        $region21: #{tpu_custom_call.1} parent=11 // pred_check
          %p187 = pneg %p118
        $region22: #{tpu_custom_call.1} parent=11 // pred_check_branch
          %189 = sbr.rel (%p187) target = $region24
        $region23: #{tpu_custom_call.1} parent=11 // pred_region
          _
        $region24: #{tpu_custom_call.1} parent=11 // pred_fallthru
          _
      $region12: #{tpu_custom_call.1} parent=5 // pred_fallthru
        _
      %p190 = scmp.lt.s32.totalorder %s17, 2
      // Predicated region
      $region25: #{tpu_custom_call.1} parent=5 // pred_check
        %p191 = pneg %p190
      $region26: #{tpu_custom_call.1} parent=5 // pred_check_branch
        %193 = sbr.rel (%p191) target = $region28
      $region27: #{tpu_custom_call.1} parent=5 // pred_region
        // Predicated region
        $region29: #{tpu_custom_call.1} parent=27 // pred_check
          %p194 = pneg %p49
        $region30: #{tpu_custom_call.1} parent=27 // pred_check_branch
          %196 = sbr.rel (%p194) target = $region32
        $region31: #{tpu_custom_call.1} parent=27 // pred_region
          %s197 = sand.u32 %s39, 1
          %s198 = scalar_lea.sflag [#allocation4], %s197
          %s199 = sand.u32 %s39, 1
          %s200 = smul.addr %s199, 8
          %s201 = scalar_lea.vmem [#allocation3], %s200
          %203 = vsyncadd %s198, 0
          %s204 = smul.addr %s24, 2
          %s205 = smul.addr %s204, 4
          %s206 = scalar_lea.hbm %s0, %s205
          %s207 = sshll.u32 %s206, 4
          %s208 = int_to_ptr.hbm [resolvable:$true] %s207
          %s209 = sshll.u32 %s201, 4
          %s210 = int_to_ptr.vmem [resolvable:$true] %s209
          %215 = dma.hbm_to_vmem [thread:$0]  %s208, 128, %s210, %s198, 64, 64, 4
        $region32: #{tpu_custom_call.1} parent=27 // pred_fallthru
          _
      $region28: #{tpu_custom_call.1} parent=5 // pred_fallthru
        _
      %p216 = scmp.le.s32.totalorder 1, %s17
      %p217 = scmp.lt.s32.totalorder %s17, 3
      %p218 = pnand %p216, %p217
      %p219 = pneg %p218
      // Predicated region
      $region33: #{tpu_custom_call.1} parent=5 // pred_check
        _
      $region34: #{tpu_custom_call.1} parent=5 // pred_check_branch
        %221 = sbr.rel (%p218) target = $region36
      $region35: #{tpu_custom_call.1} parent=5 // pred_region
        %s222 = ssub.s32 %s17, 1
        %s223 = sand.u32 %s42, 1
        %s224 = scalar_lea.sflag [#allocation4], %s223
        %s225 = sand.u32 %s42, 1
        %s226 = smul.addr %s225, 8
        %s227 = scalar_lea.vmem [#allocation3], %s226
        // Predicated region
        $region37: #{tpu_custom_call.1} parent=35 // pred_check
          %p228 = pneg %p55
        $region38: #{tpu_custom_call.1} parent=35 // pred_check_branch
          %230 = sbr.rel (%p228) target = $region40
        $region39: #{tpu_custom_call.1} parent=35 // pred_region
          %232 = dma.done %s224, 128
        $region40: #{tpu_custom_call.1} parent=35 // pred_fallthru
          _
        // Predicated region
        $region41: #{tpu_custom_call.1} parent=35 // pred_check
          %p233 = pneg %p76
        $region42: #{tpu_custom_call.1} parent=35 // pred_check_branch
          %235 = sbr.rel (%p233) target = $region44
        $region43: #{tpu_custom_call.1} parent=35 // pred_region
          %237 = dma.done [#allocation7], 3072
        $region44: #{tpu_custom_call.1} parent=35 // pred_fallthru
          _
        // Predicated region
        $region45: #{tpu_custom_call.1} parent=35 // pred_check
          %p238 = pneg %p97
        $region46: #{tpu_custom_call.1} parent=35 // pred_check_branch
          %240 = sbr.rel (%p238) target = $region48
        $region47: #{tpu_custom_call.1} parent=35 // pred_region
          %242 = dma.done [#allocation7], 1024
        $region48: #{tpu_custom_call.1} parent=35 // pred_fallthru
          _
        %s243 = sand.u32 %s42, 1
        %s244 = scalar_lea.sflag [#allocation4], %s243
        %s245 = sand.u32 %s42, 1
        %s246 = smul.addr %s245, 8
        %s247 = scalar_lea.vmem [#allocation3], %s246
        %p248 = pneg %p55
        %p249 = pneg %p52
        %p250 = pneg %p76
        %p251 = pneg %p73
        %p252 = pneg %p97
        %p253 = pneg %p94
        %p254 = pneg %p118
        %p255 = pneg %p115
        %p256 = pneg %p144
        %p257 = pneg %p141
        %s258 = sand.u32 %s131, 1
        %s259 = scalar_lea.sflag [#allocation5], %s258
        %s260 = sand.u32 %s131, 1
        %s261 = smul.addr %s260, 16
        %s262 = scalar_lea.vmem [#allocation9], %s261
        %p264 = scmp.eq.s32.totalorder %s27, 0
        // Predicated region
        $region49: #{tpu_custom_call.1} parent=35 // pred_check
          %p265 = pneg %p264
        $region50: #{tpu_custom_call.1} parent=35 // pred_check_branch
          %267 = sbr.rel (%p265) target = $region52
        $region51: #{tpu_custom_call.1} parent=35 // pred_region
          %v268 = vld [vmem:[%s3] sm:$0x1]
          %v270 = vperm.slane %v268, 0
          %272 = vst [vmem:[#allocation2] sm:$0xff] %v270
          %273 = vst [vmem:[#allocation2 + $0x8] sm:$0xff] %v270
        $region52: #{tpu_custom_call.1} parent=35 // pred_fallthru
          _
        %v274 = vld [vmem:[%s227] sm:$0xf]
        %v275 = vld [vmem:[%s227 + $0x4] sm:$0xf]
        %s276 = smul.u32 %s27, 48
        %s277 = smul.addr %s276, 4
        %s278 = scalar_lea.vmem [#allocation6], %s277
        %v279 = vld [vmem:[%s278] sm:$0xff]
        %v280 = vld [vmem:[%s278 + $0x8] sm:$0xf]
        %v281 = vld [vmem:[%s278 + $0xc] sm:$0xff]
        %v282 = vld [vmem:[%s278 + $0x14] sm:$0xf]
        %v283 = vld [vmem:[%s278 + $0x18] sm:$0xff]
        %v284 = vld [vmem:[%s278 + $0x20] sm:$0xf]
        %v285 = vld [vmem:[%s278 + $0x24] sm:$0xff]
        %v286 = vld [vmem:[%s278 + $0x2c] sm:$0xf]
        %v287 = vld [vmem:[%s278 + $0x30] sm:$0xff]
        %v288 = vld [vmem:[%s278 + $0x38] sm:$0xf]
        %v289 = vld [vmem:[%s278 + $0x3c] sm:$0xff]
        %v290 = vld [vmem:[%s278 + $0x44] sm:$0xf]
        %v291 = vld [vmem:[%s278 + $0x48] sm:$0xff]
        %v292 = vld [vmem:[%s278 + $0x50] sm:$0xf]
        %v293 = vld [vmem:[%s278 + $0x54] sm:$0xff]
        %v294 = vld [vmem:[%s278 + $0x5c] sm:$0xf]
        %v295 = vld [vmem:[%s278 + $0x60] sm:$0xff]
        %v296 = vld [vmem:[%s278 + $0x68] sm:$0xf]
        %v297 = vld [vmem:[%s278 + $0x6c] sm:$0xff]
        %v298 = vld [vmem:[%s278 + $0x74] sm:$0xf]
        %v299 = vld [vmem:[%s278 + $0x78] sm:$0xff]
        %v300 = vld [vmem:[%s278 + $0x80] sm:$0xf]
        %v301 = vld [vmem:[%s278 + $0x84] sm:$0xff]
        %v302 = vld [vmem:[%s278 + $0x8c] sm:$0xf]
        %v303 = vld [vmem:[%s278 + $0x90] sm:$0xff]
        %v304 = vld [vmem:[%s278 + $0x98] sm:$0xf]
        %v305 = vld [vmem:[%s278 + $0x9c] sm:$0xff]
        %v306 = vld [vmem:[%s278 + $0xa4] sm:$0xf]
        %v307 = vld [vmem:[%s278 + $0xa8] sm:$0xff]
        %v308 = vld [vmem:[%s278 + $0xb0] sm:$0xf]
        %v309 = vld [vmem:[%s278 + $0xb4] sm:$0xff]
        %v310 = vld [vmem:[%s278 + $0xbc] sm:$0xf]
        %s311 = smul.u32 %s27, 16
        %s312 = smul.addr %s311, 4
        %s313 = scalar_lea.vmem [#allocation8], %s312
        %v314 = vld [vmem:[%s313] sm:$0xf]
        %v315 = vld [vmem:[%s313 + $0x4] sm:$0xf]
        %v316 = vld [vmem:[%s313 + $0x8] sm:$0xf]
        %v317 = vld [vmem:[%s313 + $0xc] sm:$0xf]
        %v318 = vld [vmem:[%s313 + $0x10] sm:$0xf]
        %v319 = vld [vmem:[%s313 + $0x14] sm:$0xf]
        %v320 = vld [vmem:[%s313 + $0x18] sm:$0xf]
        %v321 = vld [vmem:[%s313 + $0x1c] sm:$0xf]
        %v322 = vld [vmem:[%s313 + $0x20] sm:$0xf]
        %v323 = vld [vmem:[%s313 + $0x24] sm:$0xf]
        %v324 = vld [vmem:[%s313 + $0x28] sm:$0xf]
        %v325 = vld [vmem:[%s313 + $0x2c] sm:$0xf]
        %v326 = vld [vmem:[%s313 + $0x30] sm:$0xf]
        %v327 = vld [vmem:[%s313 + $0x34] sm:$0xf]
        %v328 = vld [vmem:[%s313 + $0x38] sm:$0xf]
        %v329 = vld [vmem:[%s313 + $0x3c] sm:$0xf]
        %v332 = vunpack.c.l.b16 %v274
        %v333 = vunpack.c.l.b16 %v275
        %v334 = vpack.c.b16 %v333, %v332
        %v368 = vunpack.c.l.b16 %v279
        %v369 = vunpack.c.h.b16 %v279
        %v370 = vunpack.c.l.b16 %v280
        %v371 = vunpack.c.l.b16 %v281
        %v372 = vunpack.c.h.b16 %v281
        %v373 = vunpack.c.l.b16 %v282
        %v374 = vunpack.c.l.b16 %v283
        %v375 = vunpack.c.h.b16 %v283
        %v376 = vunpack.c.l.b16 %v284
        %v377 = vunpack.c.l.b16 %v285
        %v378 = vunpack.c.h.b16 %v285
        %v379 = vunpack.c.l.b16 %v286
        %v380 = vunpack.c.l.b16 %v287
        %v381 = vunpack.c.h.b16 %v287
        %v382 = vunpack.c.l.b16 %v288
        %v383 = vunpack.c.l.b16 %v289
        %v384 = vunpack.c.h.b16 %v289
        %v385 = vunpack.c.l.b16 %v290
        %v386 = vunpack.c.l.b16 %v291
        %v387 = vunpack.c.h.b16 %v291
        %v388 = vunpack.c.l.b16 %v292
        %v389 = vunpack.c.l.b16 %v293
        %v390 = vunpack.c.h.b16 %v293
        %v391 = vunpack.c.l.b16 %v294
        %v392 = vunpack.c.l.b16 %v295
        %v393 = vunpack.c.h.b16 %v295
        %v394 = vunpack.c.l.b16 %v296
        %v395 = vunpack.c.l.b16 %v297
        %v396 = vunpack.c.h.b16 %v297
        %v397 = vunpack.c.l.b16 %v298
        %v398 = vunpack.c.l.b16 %v299
        %v399 = vunpack.c.h.b16 %v299
        %v400 = vunpack.c.l.b16 %v300
        %v401 = vunpack.c.l.b16 %v301
        %v402 = vunpack.c.h.b16 %v301
        %v403 = vunpack.c.l.b16 %v302
        %v404 = vunpack.c.l.b16 %v303
        %v405 = vunpack.c.h.b16 %v303
        %v406 = vunpack.c.l.b16 %v304
        %v407 = vunpack.c.l.b16 %v305
        %v408 = vunpack.c.h.b16 %v305
        %v409 = vunpack.c.l.b16 %v306
        %v410 = vunpack.c.l.b16 %v307
        %v411 = vunpack.c.h.b16 %v307
        %v412 = vunpack.c.l.b16 %v308
        %v413 = vunpack.c.l.b16 %v309
        %v414 = vunpack.c.h.b16 %v309
        %v415 = vunpack.c.l.b16 %v310
        %v416 = vpack.c.b16 %v371, %v368
        %v417 = vpack.c.b16 %v372, %v369
        %v418 = vpack.c.b16 %v373, %v370
        %v419 = vpack.c.b16 %v377, %v374
        %v420 = vpack.c.b16 %v378, %v375
        %v421 = vpack.c.b16 %v379, %v376
        %v422 = vpack.c.b16 %v383, %v380
        %v423 = vpack.c.b16 %v384, %v381
        %v424 = vpack.c.b16 %v385, %v382
        %v425 = vpack.c.b16 %v389, %v386
        %v426 = vpack.c.b16 %v390, %v387
        %v427 = vpack.c.b16 %v391, %v388
        %v428 = vpack.c.b16 %v395, %v392
        %v429 = vpack.c.b16 %v396, %v393
        %v430 = vpack.c.b16 %v397, %v394
        %v431 = vpack.c.b16 %v401, %v398
        %v432 = vpack.c.b16 %v402, %v399
        %v433 = vpack.c.b16 %v403, %v400
        %v434 = vpack.c.b16 %v407, %v404
        %v435 = vpack.c.b16 %v408, %v405
        %v436 = vpack.c.b16 %v409, %v406
        %v437 = vpack.c.b16 %v413, %v410
        %v438 = vpack.c.b16 %v414, %v411
        %v439 = vpack.c.b16 %v415, %v412
        %464 = vmatpush.bf16.msra.mxu0 %v437
        %465 = vmatpush.bf16.msra.mxu0 %v434
        %466 = vmatpush.bf16.msra.mxu0 %v431
        %467 = vmatpush.bf16.msra.mxu0 %v428
        %468 = vmatpush.bf16.msra.mxu0 %v425
        %469 = vmatpush.bf16.msra.mxu0 %v422
        %470 = vmatpush.bf16.msra.mxu0 %v419
        %471 = vmatpush.bf16.msra.mxu0 %v416
        %472 = vmatmul.bf16.gmra.mxu0 %v334
        %v473 = vpop.f32.mrf.mxu0
        %v474 = vadd.f32 0.0, %v473
        %v475 = vpop.f32.mrf.mxu0
        %v476 = vadd.f32 0.0, %v475
        %477 = vdwg.mxu0
        %478 = vmatpush.bf16.msra.mxu0 %v438
        %479 = vmatpush.bf16.msra.mxu0 %v435
        %480 = vmatpush.bf16.msra.mxu0 %v432
        %481 = vmatpush.bf16.msra.mxu0 %v429
        %482 = vmatpush.bf16.msra.mxu0 %v426
        %483 = vmatpush.bf16.msra.mxu0 %v423
        %484 = vmatpush.bf16.msra.mxu0 %v420
        %485 = vmatpush.bf16.msra.mxu0 %v417
        %486 = vmatmul.bf16.gmra.mxu0 %v334
        %v487 = vpop.f32.mrf.mxu0
        %v488 = vadd.f32 0.0, %v487
        %v489 = vpop.f32.mrf.mxu0
        %v490 = vadd.f32 0.0, %v489
        %491 = vdwg.mxu0
        %492 = vmatpush.bf16.msra.mxu0 %v439
        %493 = vmatpush.bf16.msra.mxu0 %v436
        %494 = vmatpush.bf16.msra.mxu0 %v433
        %495 = vmatpush.bf16.msra.mxu0 %v430
        %496 = vmatpush.bf16.msra.mxu0 %v427
        %497 = vmatpush.bf16.msra.mxu0 %v424
        %498 = vmatpush.bf16.msra.mxu0 %v421
        %499 = vmatpush.bf16.msra.mxu0 %v418
        %500 = vmatmul.bf16.gmra.mxu0 %v334
        %v501 = vpop.f32.mrf.mxu0
        %v502 = vadd.f32 0.0, %v501
        %v503 = vpop.f32.mrf.mxu0
        %v504 = vadd.f32 0.0, %v503
        %505 = vdwg.mxu0
        %v506 = vpack.c.bf16 %v476, %v474
        %v507 = vpack.c.bf16 %v490, %v488
        %v508 = vpack.c.bf16 %v504, %v502
        %vm509 = vcmask 130048
        %v511 = vsel %vm509, %v506, 0
        %v514 = vsel %vm509, %v507, 0
        %516 = vmatpush.bf16.xpose.msra.mxu0 0
        %517 = vmatpush.bf16.xpose.msra.mxu0 0
        %518 = vmatpush.bf16.xpose.msra.mxu0 0
        %519 = vmatpush.bf16.xpose.msra.mxu0 0
        %520 = vmatpush.bf16.xpose.msra.mxu0 0
        %521 = vmatpush.bf16.xpose.msra.mxu0 0
        %522 = vmatpush.bf16.xpose.msra.mxu0 0
        %523 = vmatpush.bf16.xpose.msra.mxu0 %v514
        %524 = vmatmul.bf16.gmra.mxu0 %v511
        %v525 = vpop.f32.mrf.mxu0
        %v526 = vadd.f32 0.0, %v525
        %v527 = vpop.f32.mrf.mxu0
        %v528 = vadd.f32 0.0, %v527
        %529 = vdwg.mxu0
        %v530 = vsel %vm509, %v526, -inf
        %531 = vmax.xlane.f32.xlu0 %v530
        %v532 = vpop.xlane.xlu0 %531
        %v533 = vsel %vm509, %v528, -inf
        %534 = vmax.xlane.f32.xlu0 %v533
        %v535 = vpop.xlane.xlu0 %534
        %v536 = vsub.f32 %v526, %v532
        %v537 = vsub.f32 %v528, %v535
        %v538 = vmul.f32 %v536, 1.442695
        %v539 = vpow.pop %v538
        %v540 = vmul.f32 %v537, 1.442695
        %v541 = vpow.pop %v540
        %v542 = vsel %vm509, %v539, 0.0
        %543 = vadd.xlane.f32.xlu0 %v542
        %v544 = vpop.xlane.xlu0 %543
        %v545 = vsel %vm509, %v541, 0.0
        %546 = vadd.xlane.f32.xlu0 %v545
        %v547 = vpop.xlane.xlu0 %546
        %v548 = vpack.c.bf16 %v541, %v539
        %v550 = vsel %vm509, %v548, 0
        %552 = vmatpush.bf16.msra.mxu0 0
        %553 = vmatpush.bf16.msra.mxu0 0
        %554 = vmatpush.bf16.msra.mxu0 0
        %555 = vmatpush.bf16.msra.mxu0 0
        %556 = vmatpush.bf16.msra.mxu0 0
        %557 = vmatpush.bf16.msra.mxu0 0
        %558 = vmatpush.bf16.msra.mxu0 0
        %559 = vmatpush.bf16.msra.mxu0 %v508
        %560 = vmatmul.bf16.gmra.mxu0 %v550
        %v561 = vpop.f32.mrf.mxu0
        %v562 = vadd.f32 0.0, %v561
        %v563 = vpop.f32.mrf.mxu0
        %v564 = vadd.f32 0.0, %v563
        %565 = vdwg.mxu0
        %v566 = vrcp.pop %v544
        %v567 = vrcp.pop %v547
        %v568 = vmul.f32 %v562, %v566
        %v569 = vmul.f32 %v564, %v567
        %v570 = vpack.c.bf16 %v568, %v568
        %v571 = vpack.c.bf16 %v569, %v569
        %573 = vrot.lane.b32.xlu0 %v506, 112
        %v574 = vpop.permute.xlu0 %573
        %576 = vrot.lane.b32.xlu0 %v507, 112
        %v577 = vpop.permute.xlu0 %576
        %v579 = vsel %vm509, %v574, 0
        %v582 = vsel %vm509, %v577, 0
        %584 = vmatpush.bf16.xpose.msra.mxu0 0
        %585 = vmatpush.bf16.xpose.msra.mxu0 0
        %586 = vmatpush.bf16.xpose.msra.mxu0 0
        %587 = vmatpush.bf16.xpose.msra.mxu0 0
        %588 = vmatpush.bf16.xpose.msra.mxu0 0
        %589 = vmatpush.bf16.xpose.msra.mxu0 0
        %590 = vmatpush.bf16.xpose.msra.mxu0 0
        %591 = vmatpush.bf16.xpose.msra.mxu0 %v582
        %592 = vmatmul.bf16.gmra.mxu0 %v579
        %v593 = vpop.f32.mrf.mxu0
        %v594 = vadd.f32 0.0, %v593
        %v595 = vpop.f32.mrf.mxu0
        %v596 = vadd.f32 0.0, %v595
        %597 = vdwg.mxu0
        %v598 = vsel %vm509, %v594, -inf
        %599 = vmax.xlane.f32.xlu0 %v598
        %v600 = vpop.xlane.xlu0 %599
        %v601 = vsel %vm509, %v596, -inf
        %602 = vmax.xlane.f32.xlu0 %v601
        %v603 = vpop.xlane.xlu0 %602
        %v604 = vsub.f32 %v594, %v600
        %v605 = vsub.f32 %v596, %v603
        %v606 = vmul.f32 %v604, 1.442695
        %v607 = vpow.pop %v606
        %v608 = vmul.f32 %v605, 1.442695
        %v609 = vpow.pop %v608
        %v610 = vsel %vm509, %v607, 0.0
        %611 = vadd.xlane.f32.xlu0 %v610
        %v612 = vpop.xlane.xlu0 %611
        %v613 = vsel %vm509, %v609, 0.0
        %614 = vadd.xlane.f32.xlu0 %v613
        %v615 = vpop.xlane.xlu0 %614
        %v616 = vpack.c.bf16 %v609, %v607
        %618 = vrot.lane.b32.xlu0 %v508, 112
        %v619 = vpop.permute.xlu0 %618
        %v622 = vsel %vm509, %v616, 0
        %624 = vmatpush.bf16.msra.mxu0 0
        %625 = vmatpush.bf16.msra.mxu0 0
        %626 = vmatpush.bf16.msra.mxu0 0
        %627 = vmatpush.bf16.msra.mxu0 0
        %628 = vmatpush.bf16.msra.mxu0 0
        %629 = vmatpush.bf16.msra.mxu0 0
        %630 = vmatpush.bf16.msra.mxu0 0
        %631 = vmatpush.bf16.msra.mxu0 %v619
        %632 = vmatmul.bf16.gmra.mxu0 %v622
        %v633 = vpop.f32.mrf.mxu0
        %v634 = vadd.f32 0.0, %v633
        %v635 = vpop.f32.mrf.mxu0
        %v636 = vadd.f32 0.0, %v635
        %637 = vdwg.mxu0
        %v638 = vrcp.pop %v612
        %v639 = vrcp.pop %v615
        %v640 = vmul.f32 %v634, %v638
        %v641 = vmul.f32 %v636, %v639
        %v642 = vpack.c.bf16 %v640, %v640
        %v643 = vpack.c.bf16 %v641, %v641
        %644 = vrot.lane.b32.xlu0 %v506, 96
        %v645 = vpop.permute.xlu0 %644
        %646 = vrot.lane.b32.xlu0 %v507, 96
        %v647 = vpop.permute.xlu0 %646
        %v649 = vsel %vm509, %v645, 0
        %v652 = vsel %vm509, %v647, 0
        %654 = vmatpush.bf16.xpose.msra.mxu0 0
        %655 = vmatpush.bf16.xpose.msra.mxu0 0
        %656 = vmatpush.bf16.xpose.msra.mxu0 0
        %657 = vmatpush.bf16.xpose.msra.mxu0 0
        %658 = vmatpush.bf16.xpose.msra.mxu0 0
        %659 = vmatpush.bf16.xpose.msra.mxu0 0
        %660 = vmatpush.bf16.xpose.msra.mxu0 0
        %661 = vmatpush.bf16.xpose.msra.mxu0 %v652
        %662 = vmatmul.bf16.gmra.mxu0 %v649
        %v663 = vpop.f32.mrf.mxu0
        %v664 = vadd.f32 0.0, %v663
        %v665 = vpop.f32.mrf.mxu0
        %v666 = vadd.f32 0.0, %v665
        %667 = vdwg.mxu0
        %v668 = vsel %vm509, %v664, -inf
        %669 = vmax.xlane.f32.xlu0 %v668
        %v670 = vpop.xlane.xlu0 %669
        %v671 = vsel %vm509, %v666, -inf
        %672 = vmax.xlane.f32.xlu0 %v671
        %v673 = vpop.xlane.xlu0 %672
        %v674 = vsub.f32 %v664, %v670
        %v675 = vsub.f32 %v666, %v673
        %v676 = vmul.f32 %v674, 1.442695
        %v677 = vpow.pop %v676
        %v678 = vmul.f32 %v675, 1.442695
        %v679 = vpow.pop %v678
        %v680 = vsel %vm509, %v677, 0.0
        %681 = vadd.xlane.f32.xlu0 %v680
        %v682 = vpop.xlane.xlu0 %681
        %v683 = vsel %vm509, %v679, 0.0
        %684 = vadd.xlane.f32.xlu0 %v683
        %v685 = vpop.xlane.xlu0 %684
        %v686 = vpack.c.bf16 %v679, %v677
        %687 = vrot.lane.b32.xlu0 %v508, 96
        %v688 = vpop.permute.xlu0 %687
        %v691 = vsel %vm509, %v686, 0
        %693 = vmatpush.bf16.msra.mxu0 0
        %694 = vmatpush.bf16.msra.mxu0 0
        %695 = vmatpush.bf16.msra.mxu0 0
        %696 = vmatpush.bf16.msra.mxu0 0
        %697 = vmatpush.bf16.msra.mxu0 0
        %698 = vmatpush.bf16.msra.mxu0 0
        %699 = vmatpush.bf16.msra.mxu0 0
        %700 = vmatpush.bf16.msra.mxu0 %v688
        %701 = vmatmul.bf16.gmra.mxu0 %v691
        %v702 = vpop.f32.mrf.mxu0
        %v703 = vadd.f32 0.0, %v702
        %v704 = vpop.f32.mrf.mxu0
        %v705 = vadd.f32 0.0, %v704
        %706 = vdwg.mxu0
        %v707 = vrcp.pop %v682
        %v708 = vrcp.pop %v685
        %v709 = vmul.f32 %v703, %v707
        %v710 = vmul.f32 %v705, %v708
        %v711 = vpack.c.bf16 %v709, %v709
        %v712 = vpack.c.bf16 %v710, %v710
        %713 = vrot.lane.b32.xlu0 %v506, 80
        %v714 = vpop.permute.xlu0 %713
        %715 = vrot.lane.b32.xlu0 %v507, 80
        %v716 = vpop.permute.xlu0 %715
        %v718 = vsel %vm509, %v714, 0
        %v721 = vsel %vm509, %v716, 0
        %723 = vmatpush.bf16.xpose.msra.mxu0 0
        %724 = vmatpush.bf16.xpose.msra.mxu0 0
        %725 = vmatpush.bf16.xpose.msra.mxu0 0
        %726 = vmatpush.bf16.xpose.msra.mxu0 0
        %727 = vmatpush.bf16.xpose.msra.mxu0 0
        %728 = vmatpush.bf16.xpose.msra.mxu0 0
        %729 = vmatpush.bf16.xpose.msra.mxu0 0
        %730 = vmatpush.bf16.xpose.msra.mxu0 %v721
        %731 = vmatmul.bf16.gmra.mxu0 %v718
        %v732 = vpop.f32.mrf.mxu0
        %v733 = vadd.f32 0.0, %v732
        %v734 = vpop.f32.mrf.mxu0
        %v735 = vadd.f32 0.0, %v734
        %736 = vdwg.mxu0
        %v737 = vsel %vm509, %v733, -inf
        %738 = vmax.xlane.f32.xlu0 %v737
        %v739 = vpop.xlane.xlu0 %738
        %v740 = vsel %vm509, %v735, -inf
        %741 = vmax.xlane.f32.xlu0 %v740
        %v742 = vpop.xlane.xlu0 %741
        %v743 = vsub.f32 %v733, %v739
        %v744 = vsub.f32 %v735, %v742
        %v745 = vmul.f32 %v743, 1.442695
        %v746 = vpow.pop %v745
        %v747 = vmul.f32 %v744, 1.442695
        %v748 = vpow.pop %v747
        %v749 = vsel %vm509, %v746, 0.0
        %750 = vadd.xlane.f32.xlu0 %v749
        %v751 = vpop.xlane.xlu0 %750
        %v752 = vsel %vm509, %v748, 0.0
        %753 = vadd.xlane.f32.xlu0 %v752
        %v754 = vpop.xlane.xlu0 %753
        %v755 = vpack.c.bf16 %v748, %v746
        %756 = vrot.lane.b32.xlu0 %v508, 80
        %v757 = vpop.permute.xlu0 %756
        %v760 = vsel %vm509, %v755, 0
        %762 = vmatpush.bf16.msra.mxu0 0
        %763 = vmatpush.bf16.msra.mxu0 0
        %764 = vmatpush.bf16.msra.mxu0 0
        %765 = vmatpush.bf16.msra.mxu0 0
        %766 = vmatpush.bf16.msra.mxu0 0
        %767 = vmatpush.bf16.msra.mxu0 0
        %768 = vmatpush.bf16.msra.mxu0 0
        %769 = vmatpush.bf16.msra.mxu0 %v757
        %770 = vmatmul.bf16.gmra.mxu0 %v760
        %v771 = vpop.f32.mrf.mxu0
        %v772 = vadd.f32 0.0, %v771
        %v773 = vpop.f32.mrf.mxu0
        %v774 = vadd.f32 0.0, %v773
        %775 = vdwg.mxu0
        %v776 = vrcp.pop %v751
        %v777 = vrcp.pop %v754
        %v778 = vmul.f32 %v772, %v776
        %v779 = vmul.f32 %v774, %v777
        %v780 = vpack.c.bf16 %v778, %v778
        %v781 = vpack.c.bf16 %v779, %v779
        %782 = vrot.lane.b32.xlu0 %v506, 64
        %v783 = vpop.permute.xlu0 %782
        %784 = vrot.lane.b32.xlu0 %v507, 64
        %v785 = vpop.permute.xlu0 %784
        %v787 = vsel %vm509, %v783, 0
        %v790 = vsel %vm509, %v785, 0
        %792 = vmatpush.bf16.xpose.msra.mxu0 0
        %793 = vmatpush.bf16.xpose.msra.mxu0 0
        %794 = vmatpush.bf16.xpose.msra.mxu0 0
        %795 = vmatpush.bf16.xpose.msra.mxu0 0
        %796 = vmatpush.bf16.xpose.msra.mxu0 0
        %797 = vmatpush.bf16.xpose.msra.mxu0 0
        %798 = vmatpush.bf16.xpose.msra.mxu0 0
        %799 = vmatpush.bf16.xpose.msra.mxu0 %v790
        %800 = vmatmul.bf16.gmra.mxu0 %v787
        %v801 = vpop.f32.mrf.mxu0
        %v802 = vadd.f32 0.0, %v801
        %v803 = vpop.f32.mrf.mxu0
        %v804 = vadd.f32 0.0, %v803
        %805 = vdwg.mxu0
        %v806 = vsel %vm509, %v802, -inf
        %807 = vmax.xlane.f32.xlu0 %v806
        %v808 = vpop.xlane.xlu0 %807
        %v809 = vsel %vm509, %v804, -inf
        %810 = vmax.xlane.f32.xlu0 %v809
        %v811 = vpop.xlane.xlu0 %810
        %v812 = vsub.f32 %v802, %v808
        %v813 = vsub.f32 %v804, %v811
        %v814 = vmul.f32 %v812, 1.442695
        %v815 = vpow.pop %v814
        %v816 = vmul.f32 %v813, 1.442695
        %v817 = vpow.pop %v816
        %v818 = vsel %vm509, %v815, 0.0
        %819 = vadd.xlane.f32.xlu0 %v818
        %v820 = vpop.xlane.xlu0 %819
        %v821 = vsel %vm509, %v817, 0.0
        %822 = vadd.xlane.f32.xlu0 %v821
        %v823 = vpop.xlane.xlu0 %822
        %v824 = vpack.c.bf16 %v817, %v815
        %825 = vrot.lane.b32.xlu0 %v508, 64
        %v826 = vpop.permute.xlu0 %825
        %v829 = vsel %vm509, %v824, 0
        %831 = vmatpush.bf16.msra.mxu0 0
        %832 = vmatpush.bf16.msra.mxu0 0
        %833 = vmatpush.bf16.msra.mxu0 0
        %834 = vmatpush.bf16.msra.mxu0 0
        %835 = vmatpush.bf16.msra.mxu0 0
        %836 = vmatpush.bf16.msra.mxu0 0
        %837 = vmatpush.bf16.msra.mxu0 0
        %838 = vmatpush.bf16.msra.mxu0 %v826
        %839 = vmatmul.bf16.gmra.mxu0 %v829
        %v840 = vpop.f32.mrf.mxu0
        %v841 = vadd.f32 0.0, %v840
        %v842 = vpop.f32.mrf.mxu0
        %v843 = vadd.f32 0.0, %v842
        %844 = vdwg.mxu0
        %v845 = vrcp.pop %v820
        %v846 = vrcp.pop %v823
        %v847 = vmul.f32 %v841, %v845
        %v848 = vmul.f32 %v843, %v846
        %v849 = vpack.c.bf16 %v847, %v847
        %v850 = vpack.c.bf16 %v848, %v848
        %851 = vrot.lane.b32.xlu0 %v506, 48
        %v852 = vpop.permute.xlu0 %851
        %853 = vrot.lane.b32.xlu0 %v507, 48
        %v854 = vpop.permute.xlu0 %853
        %v856 = vsel %vm509, %v852, 0
        %v859 = vsel %vm509, %v854, 0
        %861 = vmatpush.bf16.xpose.msra.mxu0 0
        %862 = vmatpush.bf16.xpose.msra.mxu0 0
        %863 = vmatpush.bf16.xpose.msra.mxu0 0
        %864 = vmatpush.bf16.xpose.msra.mxu0 0
        %865 = vmatpush.bf16.xpose.msra.mxu0 0
        %866 = vmatpush.bf16.xpose.msra.mxu0 0
        %867 = vmatpush.bf16.xpose.msra.mxu0 0
        %868 = vmatpush.bf16.xpose.msra.mxu0 %v859
        %869 = vmatmul.bf16.gmra.mxu0 %v856
        %v870 = vpop.f32.mrf.mxu0
        %v871 = vadd.f32 0.0, %v870
        %v872 = vpop.f32.mrf.mxu0
        %v873 = vadd.f32 0.0, %v872
        %874 = vdwg.mxu0
        %v875 = vsel %vm509, %v871, -inf
        %876 = vmax.xlane.f32.xlu0 %v875
        %v877 = vpop.xlane.xlu0 %876
        %v878 = vsel %vm509, %v873, -inf
        %879 = vmax.xlane.f32.xlu0 %v878
        %v880 = vpop.xlane.xlu0 %879
        %v881 = vsub.f32 %v871, %v877
        %v882 = vsub.f32 %v873, %v880
        %v883 = vmul.f32 %v881, 1.442695
        %v884 = vpow.pop %v883
        %v885 = vmul.f32 %v882, 1.442695
        %v886 = vpow.pop %v885
        %v887 = vsel %vm509, %v884, 0.0
        %888 = vadd.xlane.f32.xlu0 %v887
        %v889 = vpop.xlane.xlu0 %888
        %v890 = vsel %vm509, %v886, 0.0
        %891 = vadd.xlane.f32.xlu0 %v890
        %v892 = vpop.xlane.xlu0 %891
        %v893 = vpack.c.bf16 %v886, %v884
        %894 = vrot.lane.b32.xlu0 %v508, 48
        %v895 = vpop.permute.xlu0 %894
        %v898 = vsel %vm509, %v893, 0
        %900 = vmatpush.bf16.msra.mxu0 0
        %901 = vmatpush.bf16.msra.mxu0 0
        %902 = vmatpush.bf16.msra.mxu0 0
        %903 = vmatpush.bf16.msra.mxu0 0
        %904 = vmatpush.bf16.msra.mxu0 0
        %905 = vmatpush.bf16.msra.mxu0 0
        %906 = vmatpush.bf16.msra.mxu0 0
        %907 = vmatpush.bf16.msra.mxu0 %v895
        %908 = vmatmul.bf16.gmra.mxu0 %v898
        %v909 = vpop.f32.mrf.mxu0
        %v910 = vadd.f32 0.0, %v909
        %v911 = vpop.f32.mrf.mxu0
        %v912 = vadd.f32 0.0, %v911
        %913 = vdwg.mxu0
        %v914 = vrcp.pop %v889
        %v915 = vrcp.pop %v892
        %v916 = vmul.f32 %v910, %v914
        %v917 = vmul.f32 %v912, %v915
        %v918 = vpack.c.bf16 %v916, %v916
        %v919 = vpack.c.bf16 %v917, %v917
        %920 = vrot.lane.b32.xlu0 %v506, 32
        %v921 = vpop.permute.xlu0 %920
        %922 = vrot.lane.b32.xlu0 %v507, 32
        %v923 = vpop.permute.xlu0 %922
        %v925 = vsel %vm509, %v921, 0
        %v928 = vsel %vm509, %v923, 0
        %930 = vmatpush.bf16.xpose.msra.mxu0 0
        %931 = vmatpush.bf16.xpose.msra.mxu0 0
        %932 = vmatpush.bf16.xpose.msra.mxu0 0
        %933 = vmatpush.bf16.xpose.msra.mxu0 0
        %934 = vmatpush.bf16.xpose.msra.mxu0 0
        %935 = vmatpush.bf16.xpose.msra.mxu0 0
        %936 = vmatpush.bf16.xpose.msra.mxu0 0
        %937 = vmatpush.bf16.xpose.msra.mxu0 %v928
        %938 = vmatmul.bf16.gmra.mxu0 %v925
        %v939 = vpop.f32.mrf.mxu0
        %v940 = vadd.f32 0.0, %v939
        %v941 = vpop.f32.mrf.mxu0
        %v942 = vadd.f32 0.0, %v941
        %943 = vdwg.mxu0
        %v944 = vsel %vm509, %v940, -inf
        %945 = vmax.xlane.f32.xlu0 %v944
        %v946 = vpop.xlane.xlu0 %945
        %v947 = vsel %vm509, %v942, -inf
        %948 = vmax.xlane.f32.xlu0 %v947
        %v949 = vpop.xlane.xlu0 %948
        %v950 = vsub.f32 %v940, %v946
        %v951 = vsub.f32 %v942, %v949
        %v952 = vmul.f32 %v950, 1.442695
        %v953 = vpow.pop %v952
        %v954 = vmul.f32 %v951, 1.442695
        %v955 = vpow.pop %v954
        %v956 = vsel %vm509, %v953, 0.0
        %957 = vadd.xlane.f32.xlu0 %v956
        %v958 = vpop.xlane.xlu0 %957
        %v959 = vsel %vm509, %v955, 0.0
        %960 = vadd.xlane.f32.xlu0 %v959
        %v961 = vpop.xlane.xlu0 %960
        %v962 = vpack.c.bf16 %v955, %v953
        %963 = vrot.lane.b32.xlu0 %v508, 32
        %v964 = vpop.permute.xlu0 %963
        %v967 = vsel %vm509, %v962, 0
        %969 = vmatpush.bf16.msra.mxu0 0
        %970 = vmatpush.bf16.msra.mxu0 0
        %971 = vmatpush.bf16.msra.mxu0 0
        %972 = vmatpush.bf16.msra.mxu0 0
        %973 = vmatpush.bf16.msra.mxu0 0
        %974 = vmatpush.bf16.msra.mxu0 0
        %975 = vmatpush.bf16.msra.mxu0 0
        %976 = vmatpush.bf16.msra.mxu0 %v964
        %977 = vmatmul.bf16.gmra.mxu0 %v967
        %v978 = vpop.f32.mrf.mxu0
        %v979 = vadd.f32 0.0, %v978
        %v980 = vpop.f32.mrf.mxu0
        %v981 = vadd.f32 0.0, %v980
        %982 = vdwg.mxu0
        %v983 = vrcp.pop %v958
        %v984 = vrcp.pop %v961
        %v985 = vmul.f32 %v979, %v983
        %v986 = vmul.f32 %v981, %v984
        %v987 = vpack.c.bf16 %v985, %v985
        %v988 = vpack.c.bf16 %v986, %v986
        %989 = vrot.lane.b32.xlu0 %v506, 16
        %v990 = vpop.permute.xlu0 %989
        %991 = vrot.lane.b32.xlu0 %v507, 16
        %v992 = vpop.permute.xlu0 %991
        %v994 = vsel %vm509, %v990, 0
        %v997 = vsel %vm509, %v992, 0
        %999 = vmatpush.bf16.xpose.msra.mxu0 0
        %1000 = vmatpush.bf16.xpose.msra.mxu0 0
        %1001 = vmatpush.bf16.xpose.msra.mxu0 0
        %1002 = vmatpush.bf16.xpose.msra.mxu0 0
        %1003 = vmatpush.bf16.xpose.msra.mxu0 0
        %1004 = vmatpush.bf16.xpose.msra.mxu0 0
        %1005 = vmatpush.bf16.xpose.msra.mxu0 0
        %1006 = vmatpush.bf16.xpose.msra.mxu0 %v997
        %1007 = vmatmul.bf16.gmra.mxu0 %v994
        %v1008 = vpop.f32.mrf.mxu0
        %v1009 = vadd.f32 0.0, %v1008
        %v1010 = vpop.f32.mrf.mxu0
        %v1011 = vadd.f32 0.0, %v1010
        %1012 = vdwg.mxu0
        %v1013 = vsel %vm509, %v1009, -inf
        %1014 = vmax.xlane.f32.xlu0 %v1013
        %v1015 = vpop.xlane.xlu0 %1014
        %v1016 = vsel %vm509, %v1011, -inf
        %1017 = vmax.xlane.f32.xlu0 %v1016
        %v1018 = vpop.xlane.xlu0 %1017
        %v1019 = vsub.f32 %v1009, %v1015
        %v1020 = vsub.f32 %v1011, %v1018
        %v1021 = vmul.f32 %v1019, 1.442695
        %v1022 = vpow.pop %v1021
        %v1023 = vmul.f32 %v1020, 1.442695
        %v1024 = vpow.pop %v1023
        %v1025 = vsel %vm509, %v1022, 0.0
        %1026 = vadd.xlane.f32.xlu0 %v1025
        %v1027 = vpop.xlane.xlu0 %1026
        %v1028 = vsel %vm509, %v1024, 0.0
        %1029 = vadd.xlane.f32.xlu0 %v1028
        %v1030 = vpop.xlane.xlu0 %1029
        %v1031 = vpack.c.bf16 %v1024, %v1022
        %1032 = vrot.lane.b32.xlu0 %v508, 16
        %v1033 = vpop.permute.xlu0 %1032
        %v1036 = vsel %vm509, %v1031, 0
        %1038 = vmatpush.bf16.msra.mxu0 0
        %1039 = vmatpush.bf16.msra.mxu0 0
        %1040 = vmatpush.bf16.msra.mxu0 0
        %1041 = vmatpush.bf16.msra.mxu0 0
        %1042 = vmatpush.bf16.msra.mxu0 0
        %1043 = vmatpush.bf16.msra.mxu0 0
        %1044 = vmatpush.bf16.msra.mxu0 0
        %1045 = vmatpush.bf16.msra.mxu0 %v1033
        %1046 = vmatmul.bf16.gmra.mxu0 %v1036
        %v1047 = vpop.f32.mrf.mxu0
        %v1048 = vadd.f32 0.0, %v1047
        %v1049 = vpop.f32.mrf.mxu0
        %v1050 = vadd.f32 0.0, %v1049
        %1051 = vdwg.mxu0
        %v1052 = vrcp.pop %v1027
        %v1053 = vrcp.pop %v1030
        %v1054 = vmul.f32 %v1048, %v1052
        %v1055 = vmul.f32 %v1050, %v1053
        %v1056 = vpack.c.bf16 %v1054, %v1054
        %v1057 = vpack.c.bf16 %v1055, %v1055
        %v1060 = vunpack.c.l.b16 %v570
        %v1061 = vunpack.c.l.b16 %v571
        %v1062 = vpack.c.b16 %v1061, %v1060
        %v1065 = vunpack.c.l.b16 %v642
        %v1066 = vunpack.c.l.b16 %v643
        %v1067 = vpack.c.b16 %v1066, %v1065
        %1068 = vrot.lane.b32.xlu0 %v1067, 16
        %v1069 = vpop.permute.xlu0 %1068
        %v1072 = vunpack.c.l.b16 %v711
        %v1073 = vunpack.c.l.b16 %v712
        %v1074 = vpack.c.b16 %v1073, %v1072
        %1075 = vrot.lane.b32.xlu0 %v1074, 32
        %v1076 = vpop.permute.xlu0 %1075
        %v1079 = vunpack.c.l.b16 %v780
        %v1080 = vunpack.c.l.b16 %v781
        %v1081 = vpack.c.b16 %v1080, %v1079
        %1082 = vrot.lane.b32.xlu0 %v1081, 48
        %v1083 = vpop.permute.xlu0 %1082
        %v1086 = vunpack.c.l.b16 %v849
        %v1087 = vunpack.c.l.b16 %v850
        %v1088 = vpack.c.b16 %v1087, %v1086
        %1089 = vrot.lane.b32.xlu0 %v1088, 64
        %v1090 = vpop.permute.xlu0 %1089
        %v1093 = vunpack.c.l.b16 %v918
        %v1094 = vunpack.c.l.b16 %v919
        %v1095 = vpack.c.b16 %v1094, %v1093
        %1096 = vrot.lane.b32.xlu0 %v1095, 80
        %v1097 = vpop.permute.xlu0 %1096
        %v1100 = vunpack.c.l.b16 %v987
        %v1101 = vunpack.c.l.b16 %v988
        %v1102 = vpack.c.b16 %v1101, %v1100
        %1103 = vrot.lane.b32.xlu0 %v1102, 96
        %v1104 = vpop.permute.xlu0 %1103
        %v1107 = vunpack.c.l.b16 %v1056
        %v1108 = vunpack.c.l.b16 %v1057
        %v1109 = vpack.c.b16 %v1108, %v1107
        %1110 = vrot.lane.b32.xlu0 %v1109, 112
        %v1111 = vpop.permute.xlu0 %1110
        %v1114 = vsel %vm509, %v1062, %v1069
        %vm1115 = vcmask 261120
        %v1117 = vsel %vm1115, %v1114, %v1076
        %vm1118 = vcmask 392192
        %v1120 = vsel %vm1118, %v1117, %v1083
        %vm1121 = vcmask 523264
        %v1123 = vsel %vm1121, %v1120, %v1090
        %vm1124 = vcmask 654336
        %v1126 = vsel %vm1124, %v1123, %v1097
        %vm1127 = vcmask 785408
        %v1129 = vsel %vm1127, %v1126, %v1104
        %vm1130 = vcmask 916480
        %v1132 = vsel %vm1130, %v1129, %v1111
        %v1134 = vld [vmem:[#allocation2] sm:$0xff]
        %v1135 = vld [vmem:[#allocation2 + $0x8] sm:$0xff]
        %v1152 = vunpack.c.l.b16 %v314
        %v1153 = vunpack.c.l.b16 %v315
        %v1154 = vunpack.c.l.b16 %v316
        %v1155 = vunpack.c.l.b16 %v317
        %v1156 = vunpack.c.l.b16 %v318
        %v1157 = vunpack.c.l.b16 %v319
        %v1158 = vunpack.c.l.b16 %v320
        %v1159 = vunpack.c.l.b16 %v321
        %v1160 = vunpack.c.l.b16 %v322
        %v1161 = vunpack.c.l.b16 %v323
        %v1162 = vunpack.c.l.b16 %v324
        %v1163 = vunpack.c.l.b16 %v325
        %v1164 = vunpack.c.l.b16 %v326
        %v1165 = vunpack.c.l.b16 %v327
        %v1166 = vunpack.c.l.b16 %v328
        %v1167 = vunpack.c.l.b16 %v329
        %v1168 = vpack.c.b16 %v1153, %v1152
        %v1169 = vpack.c.b16 %v1155, %v1154
        %v1170 = vpack.c.b16 %v1157, %v1156
        %v1171 = vpack.c.b16 %v1159, %v1158
        %v1172 = vpack.c.b16 %v1161, %v1160
        %v1173 = vpack.c.b16 %v1163, %v1162
        %v1174 = vpack.c.b16 %v1165, %v1164
        %v1175 = vpack.c.b16 %v1167, %v1166
        %1184 = vmatpush.bf16.msra.mxu0 %v1175
        %1185 = vmatpush.bf16.msra.mxu0 %v1174
        %1186 = vmatpush.bf16.msra.mxu0 %v1173
        %1187 = vmatpush.bf16.msra.mxu0 %v1172
        %1188 = vmatpush.bf16.msra.mxu0 %v1171
        %1189 = vmatpush.bf16.msra.mxu0 %v1170
        %1190 = vmatpush.bf16.msra.mxu0 %v1169
        %1191 = vmatpush.bf16.msra.mxu0 %v1168
        %1192 = vmatmul.bf16.gmra.mxu0 %v1132
        %v1193 = vpop.f32.mrf.mxu0
        %v1194 = vadd.f32 0.0, %v1193
        %v1195 = vpop.f32.mrf.mxu0
        %v1196 = vadd.f32 0.0, %v1195
        %1197 = vdwg.mxu0
        %v1198 = vadd.f32 %v1134, %v1194
        %v1199 = vadd.f32 %v1135, %v1196
        %1200 = vst [vmem:[#allocation2] sm:$0xff] %v1198
        %1201 = vst [vmem:[#allocation2 + $0x8] sm:$0xff] %v1199
        // Predicated region
        $region53: #{tpu_custom_call.1} parent=35 // pred_check
          %p1202 = pneg %p264
        $region54: #{tpu_custom_call.1} parent=35 // pred_check_branch
          %1204 = sbr.rel (%p1202) target = $region56
        $region55: #{tpu_custom_call.1} parent=35 // pred_region
          %v1205 = vld [vmem:[#allocation2] sm:$0xff]
          %v1206 = vld [vmem:[#allocation2 + $0x8] sm:$0xff]
          %1207 = vst [vmem:[%s262] sm:$0xff] %v1205
          %1208 = vst [vmem:[%s262 + $0x8] sm:$0xff] %v1206
        $region56: #{tpu_custom_call.1} parent=35 // pred_fallthru
          _
        %s1209 = sand.u32 %s131, 1
        %s1210 = scalar_lea.sflag [#allocation5], %s1209
        %s1211 = sand.u32 %s131, 1
        %s1212 = smul.addr %s1211, 16
        %s1213 = scalar_lea.vmem [#allocation9], %s1212
        // Predicated region
        $region57: #{tpu_custom_call.1} parent=35 // pred_check
          %p1214 = pneg %p141
        $region58: #{tpu_custom_call.1} parent=35 // pred_check_branch
          %1216 = sbr.rel (%p1214) target = $region60
        $region59: #{tpu_custom_call.1} parent=35 // pred_region
          %1218 = vsyncadd %s1210, 0
          %s1219 = smul.addr %s26, 2
          %s1220 = smul.addr %s1219, 8
          %s1221 = scalar_lea.hbm %s4, %s1220
          %s1222 = sshll.u32 %s1213, 4
          %s1223 = int_to_ptr.vmem [resolvable:$true] %s1222
          %s1224 = sshll.u32 %s1221, 4
          %s1225 = int_to_ptr.hbm [resolvable:$true] %s1224
          %1230 = dma.vmem_to_hbm [thread:$0]  %s1223, 256, %s1225, %s1210, 128, 128, 8
        $region60: #{tpu_custom_call.1} parent=35 // pred_fallthru
          _
      $region36: #{tpu_custom_call.1} parent=5 // pred_fallthru
        _
      %p1231 = scmp.le.s32.totalorder 2, %s17
      // Predicated region
      $region61: #{tpu_custom_call.1} parent=5 // pred_check
        %p1232 = pneg %p1231
      $region62: #{tpu_custom_call.1} parent=5 // pred_check_branch
        %1234 = sbr.rel (%p1232) target = $region64
      $region63: #{tpu_custom_call.1} parent=5 // pred_region
        %s1235 = ssub.s32 %s17, 2
        // Predicated region
        $region65: #{tpu_custom_call.1} parent=63 // pred_check
          %p1236 = pneg %p147
        $region66: #{tpu_custom_call.1} parent=63 // pred_check_branch
          %1238 = sbr.rel (%p1236) target = $region68
        $region67: #{tpu_custom_call.1} parent=63 // pred_region
          %s1239 = sand.u32 %s132, 1
          %s1240 = scalar_lea.sflag [#allocation5], %s1239
          %s1241 = sand.u32 %s132, 1
          %s1242 = smul.addr %s1241, 16
          %s1243 = scalar_lea.vmem [#allocation9], %s1242
          %1245 = dma.done %s1240, 256
        $region68: #{tpu_custom_call.1} parent=63 // pred_fallthru
          _
      $region64: #{tpu_custom_call.1} parent=5 // pred_fallthru
        _
    $region6: #{tpu_custom_call.1} parent=1 // loop_footer
      %s21 = sadd.s32 1, %s17
    $region7: #{tpu_custom_call.1} parent=1 // loop_footer_branch
      %16 = sbr.rel target = $region3
    $region8: #{tpu_custom_call.1} parent=1 // loop_exit
      _
    %1246 = vsyncpa [#allocation4], 1
    %s1247 = scalar_lea.sflag [#allocation4], 1
    %1248 = vsyncpa %s1247, 1
    %1249 = vsyncpa [#allocation7], 1
    %1250 = vsyncpa [#allocation5], 1
    %s1251 = scalar_lea.sflag [#allocation5], 1
    %1252 = vsyncpa %s1251, 1

</llo_original>
